<compile_context>
chip_gen: v6e
topology: v6e:2x2x1
jax: 0.10.0
libtpu: 0.0.40
codegen_flags: <defaults>
</compile_context>

<pallas_src>
import functools

import numpy as np
import jax
import jax.numpy as jnp
from jax import lax
from jax.experimental import pallas as pl
from jax.experimental.pallas import tpu as pltpu

# Synthetic small hyper-parameters (module constants, scaled down for the demo).
BERT_EMBEDDING_LENGTH = 32   # real value is 768
HIDDEN_SIZE = 32
NUM_LAYERS = 2

# Gate-column order used by the packed weights: the three sigmoid gates first,
# the tanh gate last, so the kernel applies sigmoid to one contiguous slice.
#   our column block k in (i, f, o, g)  ->  torch row block (i=0, f=1, g=2, o=3)
_TORCH_GATE_FOR_COL = (0, 1, 3, 2)


# ----------------------------------------------------------------------------
# Fused encoder kernel.
#
# Layout conventions:
#   x_ref            : (T*B, E)   time-major rows, row block s = timestep s
#   per-layer wih    : (Din, 8H)  columns per gate k in (i,f,o,g) and direction
#                                 d in (fwd,bwd): block [k*2H + d*H : k*2H+(d+1)*H]
#   per-layer whh    : (2H, 8H)   block-diagonal: rows 0:H -> fwd columns,
#                                 rows H:2H -> bwd columns (zeros elsewhere)
#   per-layer bias   : (1, 8H)    b_ih + b_hh, same column layout
#   hidden/cell state: (B, 2H)    [h_fwd | h_bwd]
#   w_down           : (2H, H)    pre-transposed AND pre-swapped so that
#                                 [h_fwd | h_bwd] @ w_down == cat(h_bwd, h_fwd) @ W^T
# ----------------------------------------------------------------------------
def _encoder_kernel(*refs, T, B, H, num_layers):
    x_ref = refs[0]
    layer_refs = refs[1:1 + 3 * num_layers]
    wdn_ref = refs[1 + 3 * num_layers]
    bdn_ref = refs[2 + 3 * num_layers]
    out_ref = refs[3 + 3 * num_layers]

    H2, H4, H6, H8 = 2 * H, 4 * H, 6 * H, 8 * H

    # Lane mask selecting the backward-direction half of every 2H-wide gate block.
    lane8 = lax.broadcasted_iota(jnp.int32, (B, H8), dimension=1)
    if (H & (H - 1)) == 0:                      # H is a power of two (it is: 32)
        bwd_mask = jnp.bitwise_and(lane8, H) != 0
    else:
        bwd_mask = (lane8 % H2) >= H
    # Lane mask selecting the forward half of the (B, 2H) = [h_fwd | h_bwd] state.
    lane2 = lax.broadcasted_iota(jnp.int32, (B, H2), dimension=1)
    fwd_half = lane2 < H

    def run_layer(gx, whh, need_seq):
        """gx: (T*B, 8H) hoisted input projection (+bias); whh: (2H, 8H)."""
        # Hoisted fwd/bwd time-merge: at scan step s the fwd direction consumes
        # timestep s and the bwd direction timestep T-1-s.  Resolve that ONCE,
        # ahead of the recurrence (independent of h/c, so the scheduler can run
        # it off the serial chain); the step body then reads a single block.
        gxm = [jnp.where(bwd_mask,
                         gx[(T - 1 - s) * B:(T - s) * B, :],
                         gx[s * B:(s + 1) * B, :])
               for s in range(T)]

        h = jnp.zeros((B, H2), jnp.float32)     # [h_fwd | h_bwd]
        c = jnp.zeros((B, H2), jnp.float32)     # [c_fwd | c_bwd]
        hs = []
        for s in range(T):                      # fully unrolled: T static & small
            gates = gxm[s] + jnp.dot(h, whh, preferred_element_type=jnp.float32)
            # Columns packed (i, f, o, g): sigmoid over the contiguous first 6H
            # lanes, tanh only over the last 2H (halves EUP work per step).
            sig = jax.nn.sigmoid(gates[:, 0:H6])
            i_g = sig[:, 0:H2]
            f_g = sig[:, H2:H4]
            o_g = sig[:, H4:H6]
            g_g = jnp.tanh(gates[:, H6:H8])
            c = f_g * c + i_g * g_g
            h = o_g * jnp.tanh(c)
            if need_seq:
                hs.append(h)
        if not need_seq:
            return h, None
        # Next layer's input, assembled off the recurrent chain:
        #   y[t] = [ fwd output at time t | bwd output at time t ]
        #        = [ hs[t][:, :H]         | hs[T-1-t][:, H:]     ]
        y = [jnp.where(fwd_half, hs[t], hs[T - 1 - t]) for t in range(T)]
        return h, jnp.concatenate(y, axis=0)     # (T*B, 2H), time-major

    inp = x_ref[...]                             # (T*B, Din) for layer 0
    h_last = None
    for l in range(num_layers):
        wih_ref, whh_ref, b_ref = layer_refs[3 * l:3 * l + 3]
        # Hoisted input projection: ONE (T*B, Din) @ (Din, 8H) matmul per layer.
        gx = (jnp.dot(inp, wih_ref[...], preferred_element_type=jnp.float32)
              + b_ref[...])
        need_seq = (l + 1 < num_layers)
        h_last, y_next = run_layer(gx, whh_ref[...], need_seq)
        if need_seq:
            inp = y_next                         # stays on-chip (vregs/VMEM)

    # Fused downsample Linear epilogue:
    #   out = cat(h_bwd, h_fwd) @ W_down^T + b_down  ==  [h_fwd|h_bwd] @ wdn + bdn
    out_ref[...] = (jnp.dot(h_last, wdn_ref[...], preferred_element_type=jnp.float32)
                    + bdn_ref[...])


# ----------------------------------------------------------------------------
# Wrapper: one pallas_call for the whole encoder.
# ----------------------------------------------------------------------------
def encoder_forward(x_bte, packed):
    """x_bte: (B, T, E) batch-first like the PyTorch module. Returns (B, H)."""
    B, T, E = x_bte.shape
    H = packed["w_down"].shape[1]
    layers = packed["layers"]
    num_layers = len(layers)

    # Pad batch to a sublane multiple: the MXU/VPU/EUP pay for 8 sublanes per
    # pass anyway, so padded rows are free and real batches >= 8 run ~4x denser.
    B_pad = max(8, -(-B // 8) * 8)
    if B_pad != B:
        x_bte = jnp.pad(x_bte, ((0, B_pad - B), (0, 0), (0, 0)))

    # TODO(synk): at production scale (E=768, long T) replace this wrapper
    # transpose with a time-chunk grid whose BlockSpec index_map pulls
    # (chunk_T, B, E) tiles straight from (B, T, E), cast the MXU operands to
    # bf16, carry h/c across grid steps with lax.fori_loop(unroll=4..8), add a
    # parallel batch grid axis for v7x's second TensorCore (re-derive chunk_T
    # for its 64 MiB VMEM), and split the recurrent dot per direction on v5e
    # once 2H > 128.
    x_flat = jnp.transpose(x_bte, (1, 0, 2)).reshape(T * B_pad, E).astype(jnp.float32)

    vmem = pl.BlockSpec(memory_space=pltpu.MemorySpace.VMEM)
    args = [x_flat]
    for lp in layers:
        args += [lp["wih"], lp["whh"], lp["b"]]
    args += [packed["w_down"], packed["b_down"]]

    kernel = functools.partial(_encoder_kernel, T=T, B=B_pad, H=H,
                               num_layers=num_layers)
    out = pl.pallas_call(
        kernel,
        out_shape=jax.ShapeDtypeStruct((B_pad, H), jnp.float32),
        in_specs=[vmem] * len(args),
        out_specs=vmem,
    )(*args)
    return out[:B]


# ----------------------------------------------------------------------------
# Parameters: raw (PyTorch nn.LSTM / nn.Linear shaped) + packing into the fused,
# pre-transposed kernel layout.  Packing happens once at parameter-build time.
# ----------------------------------------------------------------------------
def make_raw_params(key, embed, hidden, num_layers):
    params = {"lstm": []}
    scale = 0.1
    for layer in range(num_layers):
        d_in = embed if layer == 0 else 2 * hidden
        key, *ks = jax.random.split(key, 11)
        layer_p = {
            "w_ih_f": scale * jax.random.normal(ks[0], (4 * hidden, d_in), jnp.float32),
            "w_hh_f": scale * jax.random.normal(ks[1], (4 * hidden, hidden), jnp.float32),
            "b_ih_f": scale * jax.random.normal(ks[2], (4 * hidden,), jnp.float32),
            "b_hh_f": scale * jax.random.normal(ks[3], (4 * hidden,), jnp.float32),
            "w_ih_b": scale * jax.random.normal(ks[4], (4 * hidden, d_in), jnp.float32),
            "w_hh_b": scale * jax.random.normal(ks[5], (4 * hidden, hidden), jnp.float32),
            "b_ih_b": scale * jax.random.normal(ks[6], (4 * hidden,), jnp.float32),
            "b_hh_b": scale * jax.random.normal(ks[7], (4 * hidden,), jnp.float32),
        }
        params["lstm"].append(layer_p)
    key, k1, k2 = jax.random.split(key, 3)
    params["w_down"] = scale * jax.random.normal(k1, (hidden, 2 * hidden), jnp.float32)
    params["b_down"] = scale * jax.random.normal(k2, (hidden,), jnp.float32)
    return params


def pack_params(raw, hidden):
    """Pack PyTorch-layout weights into the fused / pre-transposed kernel layout.

    Column order per 2H gate block: (i, f, o, g), fwd half then bwd half, so the
    kernel can sigmoid the first 6H columns and tanh only the last 2H.
    """
    H = hidden
    packed = {"layers": []}
    for lp in raw["lstm"]:
        d_in = lp["w_ih_f"].shape[1]
        wih = np.zeros((d_in, 8 * H), np.float32)
        whh = np.zeros((2 * H, 8 * H), np.float32)
        b = np.zeros((1, 8 * H), np.float32)
        for d_idx, d in enumerate(("f", "b")):
            w_ih = np.asarray(lp[f"w_ih_{d}"])                  # (4H, Din) torch order i,f,g,o
            w_hh = np.asarray(lp[f"w_hh_{d}"])                  # (4H, H)
            bias = np.asarray(lp[f"b_ih_{d}"]) + np.asarray(lp[f"b_hh_{d}"])  # (4H,)
            for k_col, k_t in enumerate(_TORCH_GATE_FOR_COL):   # columns: i, f, o, g
                c0 = k_col * 2 * H + d_idx * H
                wih[:, c0:c0 + H] = w_ih[k_t * H:(k_t + 1) * H, :].T
                whh[d_idx * H:(d_idx + 1) * H, c0:c0 + H] = w_hh[k_t * H:(k_t + 1) * H, :].T
                b[0, c0:c0 + H] = bias[k_t * H:(k_t + 1) * H]
        packed["layers"].append({"wih": jnp.asarray(wih),
                                 "whh": jnp.asarray(whh),
                                 "b": jnp.asarray(b)})
    # out = cat(h_bwd, h_fwd) @ W_down^T + b  ==  [h_fwd | h_bwd] @ wdn + b
    w_down = np.asarray(raw["w_down"])                          # (H, 2H)
    wdn = np.concatenate([w_down[:, H:2 * H].T, w_down[:, 0:H].T], axis=0)
    packed["w_down"] = jnp.asarray(wdn.astype(np.float32))      # (2H, H)
    packed["b_down"] = jnp.asarray(np.asarray(raw["b_down"])[None, :].astype(np.float32))
    return packed


# ----------------------------------------------------------------------------
# Pure-JAX reference (direct translation of the PyTorch module) for verification.
# ----------------------------------------------------------------------------
def encoder_reference(x_bte, raw):
    hp = jax.lax.Precision.HIGHEST
    x = x_bte.astype(jnp.float32)
    B, T, _ = x.shape
    inp = x
    finals = None
    for lp in raw["lstm"]:
        outs, fin = [], []
        H = lp["w_hh_f"].shape[1]
        for d in ("f", "b"):
            w_ih, w_hh = lp[f"w_ih_{d}"], lp[f"w_hh_{d}"]
            bias = lp[f"b_ih_{d}"] + lp[f"b_hh_{d}"]
            seq = inp if d == "f" else inp[:, ::-1]
            h = jnp.zeros((B, H), jnp.float32)
            c = jnp.zeros((B, H), jnp.float32)
            ys = []
            for t in range(T):
                g = (jnp.dot(seq[:, t], w_ih.T, precision=hp)
                     + jnp.dot(h, w_hh.T, precision=hp) + bias)
                i = jax.nn.sigmoid(g[:, 0:H])
                f = jax.nn.sigmoid(g[:, H:2 * H])
                gg = jnp.tanh(g[:, 2 * H:3 * H])
                o = jax.nn.sigmoid(g[:, 3 * H:4 * H])
                c = f * c + i * gg
                h = o * jnp.tanh(c)
                ys.append(h)
            y = jnp.stack(ys, axis=1)
            if d == "b":
                y = y[:, ::-1]
            outs.append(y)
            fin.append(h)
        inp = jnp.concatenate(outs, axis=-1)
        finals = fin
    # torch.cat((h[-1], h[-2]), dim=1) == [last-layer backward, last-layer forward]
    h_cat = jnp.concatenate([finals[1], finals[0]], axis=-1)
    return jnp.dot(h_cat, raw["w_down"].T, precision=hp) + raw["b_down"][None, :]


if __name__ == "__main__":
    B, T = 2, 8
    key = jax.random.PRNGKey(0)
    key, kx, kp = jax.random.split(key, 3)

    x = jax.random.normal(kx, (B, T, BERT_EMBEDDING_LENGTH), jnp.float32)
    raw = make_raw_params(kp, BERT_EMBEDDING_LENGTH, HIDDEN_SIZE, NUM_LAYERS)
    packed = pack_params(raw, HIDDEN_SIZE)

    out = jax.block_until_ready(jax.jit(encoder_forward)(x, packed))

    assert out.shape == (B, HIDDEN_SIZE), out.shape
    assert out.dtype == jnp.float32
    assert bool(jnp.all(jnp.isfinite(out)))

    ref = encoder_reference(x, raw)
    err = float(jnp.max(jnp.abs(out - ref)))
    assert err < 1e-3, f"mismatch vs pure-JAX reference: max abs err {err}"

    print("KERNEL_OK")
</pallas_src>

<mosaic_0001>
module attributes {stable_mosaic.version = 11 : i64} {
  func.func @_encoder_kernel(%arg0: memref<64x32xf32, #tpu.memory_space<vmem>>, %arg1: memref<32x256xf32, #tpu.memory_space<vmem>>, %arg2: memref<64x256xf32, #tpu.memory_space<vmem>>, %arg3: memref<1x256xf32, #tpu.memory_space<vmem>>, %arg4: memref<64x256xf32, #tpu.memory_space<vmem>>, %arg5: memref<64x256xf32, #tpu.memory_space<vmem>>, %arg6: memref<1x256xf32, #tpu.memory_space<vmem>>, %arg7: memref<64x32xf32, #tpu.memory_space<vmem>>, %arg8: memref<1x32xf32, #tpu.memory_space<vmem>>, %arg9: memref<8x32xf32, #tpu.memory_space<vmem>>) attributes {dimension_semantics = [], scalar_prefetch = 0 : i64, scratch_operands = 0 : i64, tpu.core_type = #tpu.core_type<tc>} {
    %0 = tpu.iota {dimensions = array<i32: 1>} : vector<8x256xi32>
    %c32_i32 = arith.constant 32 : i32
    %1 = vector.broadcast %c32_i32 : i32 to vector<8x256xi32>
    %2 = arith.andi %0, %1 : vector<8x256xi32>
    %c0_i32 = arith.constant 0 : i32
    %3 = vector.broadcast %c0_i32 : i32 to vector<8x256xi32>
    %4 = arith.cmpi ne, %2, %3 : vector<8x256xi32>
    %5 = tpu.iota {dimensions = array<i32: 1>} : vector<8x64xi32>
    %c32_i32_0 = arith.constant 32 : i32
    %6 = vector.broadcast %c32_i32_0 : i32 to vector<8x64xi32>
    %7 = arith.cmpi slt, %5, %6 : vector<8x64xi32>
    %c0 = arith.constant 0 : index
    %c0_1 = arith.constant 0 : index
    %8 = vector.load %arg0[%c0, %c0_1] : memref<64x32xf32, #tpu.memory_space<vmem>>, vector<64x32xf32>
    %c0_2 = arith.constant 0 : index
    %c0_3 = arith.constant 0 : index
    %9 = vector.load %arg1[%c0_2, %c0_3] : memref<32x256xf32, #tpu.memory_space<vmem>>, vector<32x256xf32>
    %cst = arith.constant dense<0.000000e+00> : vector<64x256xf32>
    %10 = tpu.matmul %8, %9, %cst {dimension_numbers = #tpu.dot_dimension_numbers<[1], [0], [0], [1], [0, 0, 1, 1], [], []>} : vector<64x32xf32>, vector<32x256xf32>, vector<64x256xf32> -> vector<64x256xf32>
    %c0_4 = arith.constant 0 : index
    %c0_5 = arith.constant 0 : index
    %11 = vector.load %arg3[%c0_4, %c0_5] : memref<1x256xf32, #tpu.memory_space<vmem>>, vector<1x256xf32>
    %12 = vector.broadcast %11 : vector<1x256xf32> to vector<64x256xf32>
    %13 = arith.addf %10, %12 : vector<64x256xf32>
    %c0_6 = arith.constant 0 : index
    %c0_7 = arith.constant 0 : index
    %14 = vector.load %arg2[%c0_6, %c0_7] : memref<64x256xf32, #tpu.memory_space<vmem>>, vector<64x256xf32>
    %15 = vector.extract_strided_slice %13 {offsets = [56, 0], sizes = [8, 256], strides = [1, 1]} : vector<64x256xf32> to vector<8x256xf32>
    %16 = vector.extract_strided_slice %13 {offsets = [0, 0], sizes = [8, 256], strides = [1, 1]} : vector<64x256xf32> to vector<8x256xf32>
    %17 = arith.select %4, %15, %16 : vector<8x256xi1>, vector<8x256xf32>
    %18 = vector.extract_strided_slice %13 {offsets = [48, 0], sizes = [8, 256], strides = [1, 1]} : vector<64x256xf32> to vector<8x256xf32>
    %19 = vector.extract_strided_slice %13 {offsets = [8, 0], sizes = [8, 256], strides = [1, 1]} : vector<64x256xf32> to vector<8x256xf32>
    %20 = arith.select %4, %18, %19 : vector<8x256xi1>, vector<8x256xf32>
    %21 = vector.extract_strided_slice %13 {offsets = [40, 0], sizes = [8, 256], strides = [1, 1]} : vector<64x256xf32> to vector<8x256xf32>
    %22 = vector.extract_strided_slice %13 {offsets = [16, 0], sizes = [8, 256], strides = [1, 1]} : vector<64x256xf32> to vector<8x256xf32>
    %23 = arith.select %4, %21, %22 : vector<8x256xi1>, vector<8x256xf32>
    %24 = vector.extract_strided_slice %13 {offsets = [32, 0], sizes = [8, 256], strides = [1, 1]} : vector<64x256xf32> to vector<8x256xf32>
    %25 = vector.extract_strided_slice %13 {offsets = [24, 0], sizes = [8, 256], strides = [1, 1]} : vector<64x256xf32> to vector<8x256xf32>
    %26 = arith.select %4, %24, %25 : vector<8x256xi1>, vector<8x256xf32>
    %27 = vector.extract_strided_slice %13 {offsets = [24, 0], sizes = [8, 256], strides = [1, 1]} : vector<64x256xf32> to vector<8x256xf32>
    %28 = vector.extract_strided_slice %13 {offsets = [32, 0], sizes = [8, 256], strides = [1, 1]} : vector<64x256xf32> to vector<8x256xf32>
    %29 = arith.select %4, %27, %28 : vector<8x256xi1>, vector<8x256xf32>
    %30 = vector.extract_strided_slice %13 {offsets = [16, 0], sizes = [8, 256], strides = [1, 1]} : vector<64x256xf32> to vector<8x256xf32>
    %31 = vector.extract_strided_slice %13 {offsets = [40, 0], sizes = [8, 256], strides = [1, 1]} : vector<64x256xf32> to vector<8x256xf32>
    %32 = arith.select %4, %30, %31 : vector<8x256xi1>, vector<8x256xf32>
    %33 = vector.extract_strided_slice %13 {offsets = [8, 0], sizes = [8, 256], strides = [1, 1]} : vector<64x256xf32> to vector<8x256xf32>
    %34 = vector.extract_strided_slice %13 {offsets = [48, 0], sizes = [8, 256], strides = [1, 1]} : vector<64x256xf32> to vector<8x256xf32>
    %35 = arith.select %4, %33, %34 : vector<8x256xi1>, vector<8x256xf32>
    %36 = vector.extract_strided_slice %13 {offsets = [0, 0], sizes = [8, 256], strides = [1, 1]} : vector<64x256xf32> to vector<8x256xf32>
    %37 = vector.extract_strided_slice %13 {offsets = [56, 0], sizes = [8, 256], strides = [1, 1]} : vector<64x256xf32> to vector<8x256xf32>
    %38 = arith.select %4, %36, %37 : vector<8x256xi1>, vector<8x256xf32>
    %cst_8 = arith.constant 0.000000e+00 : f32
    %39 = vector.broadcast %cst_8 : f32 to vector<8x64xf32>
    %cst_9 = arith.constant 0.000000e+00 : f32
    %40 = vector.broadcast %cst_9 : f32 to vector<8x64xf32>
    %cst_10 = arith.constant dense<0.000000e+00> : vector<8x256xf32>
    %41 = tpu.matmul %39, %14, %cst_10 {dimension_numbers = #tpu.dot_dimension_numbers<[1], [0], [0], [1], [0, 0, 1, 1], [], []>} : vector<8x64xf32>, vector<64x256xf32>, vector<8x256xf32> -> vector<8x256xf32>
    %42 = arith.addf %17, %41 : vector<8x256xf32>
    %43 = vector.extract_strided_slice %42 {offsets = [0, 0], sizes = [8, 192], strides = [1, 1]} : vector<8x256xf32> to vector<8x192xf32>
    %44 = arith.negf %43 : vector<8x192xf32>
    %45 = math.exp %44 : vector<8x192xf32>
    %cst_11 = arith.constant 1.000000e+00 : f32
    %46 = vector.broadcast %cst_11 : f32 to vector<8x192xf32>
    %47 = arith.addf %46, %45 : vector<8x192xf32>
    %48 = arith.divf %46, %47 : vector<8x192xf32>
    %49 = vector.extract_strided_slice %48 {offsets = [0, 0], sizes = [8, 64], strides = [1, 1]} : vector<8x192xf32> to vector<8x64xf32>
    %50 = vector.extract_strided_slice %48 {offsets = [0, 64], sizes = [8, 64], strides = [1, 1]} : vector<8x192xf32> to vector<8x64xf32>
    %51 = vector.extract_strided_slice %48 {offsets = [0, 128], sizes = [8, 64], strides = [1, 1]} : vector<8x192xf32> to vector<8x64xf32>
    %52 = vector.extract_strided_slice %42 {offsets = [0, 192], sizes = [8, 64], strides = [1, 1]} : vector<8x256xf32> to vector<8x64xf32>
    %53 = math.tanh %52 : vector<8x64xf32>
    %54 = arith.mulf %50, %40 : vector<8x64xf32>
    %55 = arith.mulf %49, %53 : vector<8x64xf32>
    %56 = arith.addf %54, %55 : vector<8x64xf32>
    %57 = math.tanh %56 : vector<8x64xf32>
    %58 = arith.mulf %51, %57 : vector<8x64xf32>
    %cst_12 = arith.constant dense<0.000000e+00> : vector<8x256xf32>
    %59 = tpu.matmul %58, %14, %cst_12 {dimension_numbers = #tpu.dot_dimension_numbers<[1], [0], [0], [1], [0, 0, 1, 1], [], []>} : vector<8x64xf32>, vector<64x256xf32>, vector<8x256xf32> -> vector<8x256xf32>
    %60 = arith.addf %20, %59 : vector<8x256xf32>
    %61 = vector.extract_strided_slice %60 {offsets = [0, 0], sizes = [8, 192], strides = [1, 1]} : vector<8x256xf32> to vector<8x192xf32>
    %62 = arith.negf %61 : vector<8x192xf32>
    %63 = math.exp %62 : vector<8x192xf32>
    %cst_13 = arith.constant 1.000000e+00 : f32
    %64 = vector.broadcast %cst_13 : f32 to vector<8x192xf32>
    %65 = arith.addf %64, %63 : vector<8x192xf32>
    %66 = arith.divf %64, %65 : vector<8x192xf32>
    %67 = vector.extract_strided_slice %66 {offsets = [0, 0], sizes = [8, 64], strides = [1, 1]} : vector<8x192xf32> to vector<8x64xf32>
    %68 = vector.extract_strided_slice %66 {offsets = [0, 64], sizes = [8, 64], strides = [1, 1]} : vector<8x192xf32> to vector<8x64xf32>
    %69 = vector.extract_strided_slice %66 {offsets = [0, 128], sizes = [8, 64], strides = [1, 1]} : vector<8x192xf32> to vector<8x64xf32>
    %70 = vector.extract_strided_slice %60 {offsets = [0, 192], sizes = [8, 64], strides = [1, 1]} : vector<8x256xf32> to vector<8x64xf32>
    %71 = math.tanh %70 : vector<8x64xf32>
    %72 = arith.mulf %68, %56 : vector<8x64xf32>
    %73 = arith.mulf %67, %71 : vector<8x64xf32>
    %74 = arith.addf %72, %73 : vector<8x64xf32>
    %75 = math.tanh %74 : vector<8x64xf32>
    %76 = arith.mulf %69, %75 : vector<8x64xf32>
    %cst_14 = arith.constant dense<0.000000e+00> : vector<8x256xf32>
    %77 = tpu.matmul %76, %14, %cst_14 {dimension_numbers = #tpu.dot_dimension_numbers<[1], [0], [0], [1], [0, 0, 1, 1], [], []>} : vector<8x64xf32>, vector<64x256xf32>, vector<8x256xf32> -> vector<8x256xf32>
    %78 = arith.addf %23, %77 : vector<8x256xf32>
    %79 = vector.extract_strided_slice %78 {offsets = [0, 0], sizes = [8, 192], strides = [1, 1]} : vector<8x256xf32> to vector<8x192xf32>
    %80 = arith.negf %79 : vector<8x192xf32>
    %81 = math.exp %80 : vector<8x192xf32>
    %cst_15 = arith.constant 1.000000e+00 : f32
    %82 = vector.broadcast %cst_15 : f32 to vector<8x192xf32>
    %83 = arith.addf %82, %81 : vector<8x192xf32>
    %84 = arith.divf %82, %83 : vector<8x192xf32>
    %85 = vector.extract_strided_slice %84 {offsets = [0, 0], sizes = [8, 64], strides = [1, 1]} : vector<8x192xf32> to vector<8x64xf32>
    %86 = vector.extract_strided_slice %84 {offsets = [0, 64], sizes = [8, 64], strides = [1, 1]} : vector<8x192xf32> to vector<8x64xf32>
    %87 = vector.extract_strided_slice %84 {offsets = [0, 128], sizes = [8, 64], strides = [1, 1]} : vector<8x192xf32> to vector<8x64xf32>
    %88 = vector.extract_strided_slice %78 {offsets = [0, 192], sizes = [8, 64], strides = [1, 1]} : vector<8x256xf32> to vector<8x64xf32>
    %89 = math.tanh %88 : vector<8x64xf32>
    %90 = arith.mulf %86, %74 : vector<8x64xf32>
    %91 = arith.mulf %85, %89 : vector<8x64xf32>
    %92 = arith.addf %90, %91 : vector<8x64xf32>
    %93 = math.tanh %92 : vector<8x64xf32>
    %94 = arith.mulf %87, %93 : vector<8x64xf32>
    %cst_16 = arith.constant dense<0.000000e+00> : vector<8x256xf32>
    %95 = tpu.matmul %94, %14, %cst_16 {dimension_numbers = #tpu.dot_dimension_numbers<[1], [0], [0], [1], [0, 0, 1, 1], [], []>} : vector<8x64xf32>, vector<64x256xf32>, vector<8x256xf32> -> vector<8x256xf32>
    %96 = arith.addf %26, %95 : vector<8x256xf32>
    %97 = vector.extract_strided_slice %96 {offsets = [0, 0], sizes = [8, 192], strides = [1, 1]} : vector<8x256xf32> to vector<8x192xf32>
    %98 = arith.negf %97 : vector<8x192xf32>
    %99 = math.exp %98 : vector<8x192xf32>
    %cst_17 = arith.constant 1.000000e+00 : f32
    %100 = vector.broadcast %cst_17 : f32 to vector<8x192xf32>
    %101 = arith.addf %100, %99 : vector<8x192xf32>
    %102 = arith.divf %100, %101 : vector<8x192xf32>
    %103 = vector.extract_strided_slice %102 {offsets = [0, 0], sizes = [8, 64], strides = [1, 1]} : vector<8x192xf32> to vector<8x64xf32>
    %104 = vector.extract_strided_slice %102 {offsets = [0, 64], sizes = [8, 64], strides = [1, 1]} : vector<8x192xf32> to vector<8x64xf32>
    %105 = vector.extract_strided_slice %102 {offsets = [0, 128], sizes = [8, 64], strides = [1, 1]} : vector<8x192xf32> to vector<8x64xf32>
    %106 = vector.extract_strided_slice %96 {offsets = [0, 192], sizes = [8, 64], strides = [1, 1]} : vector<8x256xf32> to vector<8x64xf32>
    %107 = math.tanh %106 : vector<8x64xf32>
    %108 = arith.mulf %104, %92 : vector<8x64xf32>
    %109 = arith.mulf %103, %107 : vector<8x64xf32>
    %110 = arith.addf %108, %109 : vector<8x64xf32>
    %111 = math.tanh %110 : vector<8x64xf32>
    %112 = arith.mulf %105, %111 : vector<8x64xf32>
    %cst_18 = arith.constant dense<0.000000e+00> : vector<8x256xf32>
    %113 = tpu.matmul %112, %14, %cst_18 {dimension_numbers = #tpu.dot_dimension_numbers<[1], [0], [0], [1], [0, 0, 1, 1], [], []>} : vector<8x64xf32>, vector<64x256xf32>, vector<8x256xf32> -> vector<8x256xf32>
    %114 = arith.addf %29, %113 : vector<8x256xf32>
    %115 = vector.extract_strided_slice %114 {offsets = [0, 0], sizes = [8, 192], strides = [1, 1]} : vector<8x256xf32> to vector<8x192xf32>
    %116 = arith.negf %115 : vector<8x192xf32>
    %117 = math.exp %116 : vector<8x192xf32>
    %cst_19 = arith.constant 1.000000e+00 : f32
    %118 = vector.broadcast %cst_19 : f32 to vector<8x192xf32>
    %119 = arith.addf %118, %117 : vector<8x192xf32>
    %120 = arith.divf %118, %119 : vector<8x192xf32>
    %121 = vector.extract_strided_slice %120 {offsets = [0, 0], sizes = [8, 64], strides = [1, 1]} : vector<8x192xf32> to vector<8x64xf32>
    %122 = vector.extract_strided_slice %120 {offsets = [0, 64], sizes = [8, 64], strides = [1, 1]} : vector<8x192xf32> to vector<8x64xf32>
    %123 = vector.extract_strided_slice %120 {offsets = [0, 128], sizes = [8, 64], strides = [1, 1]} : vector<8x192xf32> to vector<8x64xf32>
    %124 = vector.extract_strided_slice %114 {offsets = [0, 192], sizes = [8, 64], strides = [1, 1]} : vector<8x256xf32> to vector<8x64xf32>
    %125 = math.tanh %124 : vector<8x64xf32>
    %126 = arith.mulf %122, %110 : vector<8x64xf32>
    %127 = arith.mulf %121, %125 : vector<8x64xf32>
    %128 = arith.addf %126, %127 : vector<8x64xf32>
    %129 = math.tanh %128 : vector<8x64xf32>
    %130 = arith.mulf %123, %129 : vector<8x64xf32>
    %cst_20 = arith.constant dense<0.000000e+00> : vector<8x256xf32>
    %131 = tpu.matmul %130, %14, %cst_20 {dimension_numbers = #tpu.dot_dimension_numbers<[1], [0], [0], [1], [0, 0, 1, 1], [], []>} : vector<8x64xf32>, vector<64x256xf32>, vector<8x256xf32> -> vector<8x256xf32>
    %132 = arith.addf %32, %131 : vector<8x256xf32>
    %133 = vector.extract_strided_slice %132 {offsets = [0, 0], sizes = [8, 192], strides = [1, 1]} : vector<8x256xf32> to vector<8x192xf32>
    %134 = arith.negf %133 : vector<8x192xf32>
    %135 = math.exp %134 : vector<8x192xf32>
    %cst_21 = arith.constant 1.000000e+00 : f32
    %136 = vector.broadcast %cst_21 : f32 to vector<8x192xf32>
    %137 = arith.addf %136, %135 : vector<8x192xf32>
    %138 = arith.divf %136, %137 : vector<8x192xf32>
    %139 = vector.extract_strided_slice %138 {offsets = [0, 0], sizes = [8, 64], strides = [1, 1]} : vector<8x192xf32> to vector<8x64xf32>
    %140 = vector.extract_strided_slice %138 {offsets = [0, 64], sizes = [8, 64], strides = [1, 1]} : vector<8x192xf32> to vector<8x64xf32>
    %141 = vector.extract_strided_slice %138 {offsets = [0, 128], sizes = [8, 64], strides = [1, 1]} : vector<8x192xf32> to vector<8x64xf32>
    %142 = vector.extract_strided_slice %132 {offsets = [0, 192], sizes = [8, 64], strides = [1, 1]} : vector<8x256xf32> to vector<8x64xf32>
    %143 = math.tanh %142 : vector<8x64xf32>
    %144 = arith.mulf %140, %128 : vector<8x64xf32>
    %145 = arith.mulf %139, %143 : vector<8x64xf32>
    %146 = arith.addf %144, %145 : vector<8x64xf32>
    %147 = math.tanh %146 : vector<8x64xf32>
    %148 = arith.mulf %141, %147 : vector<8x64xf32>
    %cst_22 = arith.constant dense<0.000000e+00> : vector<8x256xf32>
    %149 = tpu.matmul %148, %14, %cst_22 {dimension_numbers = #tpu.dot_dimension_numbers<[1], [0], [0], [1], [0, 0, 1, 1], [], []>} : vector<8x64xf32>, vector<64x256xf32>, vector<8x256xf32> -> vector<8x256xf32>
    %150 = arith.addf %35, %149 : vector<8x256xf32>
    %151 = vector.extract_strided_slice %150 {offsets = [0, 0], sizes = [8, 192], strides = [1, 1]} : vector<8x256xf32> to vector<8x192xf32>
    %152 = arith.negf %151 : vector<8x192xf32>
    %153 = math.exp %152 : vector<8x192xf32>
    %cst_23 = arith.constant 1.000000e+00 : f32
    %154 = vector.broadcast %cst_23 : f32 to vector<8x192xf32>
    %155 = arith.addf %154, %153 : vector<8x192xf32>
    %156 = arith.divf %154, %155 : vector<8x192xf32>
    %157 = vector.extract_strided_slice %156 {offsets = [0, 0], sizes = [8, 64], strides = [1, 1]} : vector<8x192xf32> to vector<8x64xf32>
    %158 = vector.extract_strided_slice %156 {offsets = [0, 64], sizes = [8, 64], strides = [1, 1]} : vector<8x192xf32> to vector<8x64xf32>
    %159 = vector.extract_strided_slice %156 {offsets = [0, 128], sizes = [8, 64], strides = [1, 1]} : vector<8x192xf32> to vector<8x64xf32>
    %160 = vector.extract_strided_slice %150 {offsets = [0, 192], sizes = [8, 64], strides = [1, 1]} : vector<8x256xf32> to vector<8x64xf32>
    %161 = math.tanh %160 : vector<8x64xf32>
    %162 = arith.mulf %158, %146 : vector<8x64xf32>
    %163 = arith.mulf %157, %161 : vector<8x64xf32>
    %164 = arith.addf %162, %163 : vector<8x64xf32>
    %165 = math.tanh %164 : vector<8x64xf32>
    %166 = arith.mulf %159, %165 : vector<8x64xf32>
    %cst_24 = arith.constant dense<0.000000e+00> : vector<8x256xf32>
    %167 = tpu.matmul %166, %14, %cst_24 {dimension_numbers = #tpu.dot_dimension_numbers<[1], [0], [0], [1], [0, 0, 1, 1], [], []>} : vector<8x64xf32>, vector<64x256xf32>, vector<8x256xf32> -> vector<8x256xf32>
    %168 = arith.addf %38, %167 : vector<8x256xf32>
    %169 = vector.extract_strided_slice %168 {offsets = [0, 0], sizes = [8, 192], strides = [1, 1]} : vector<8x256xf32> to vector<8x192xf32>
    %170 = arith.negf %169 : vector<8x192xf32>
    %171 = math.exp %170 : vector<8x192xf32>
    %cst_25 = arith.constant 1.000000e+00 : f32
    %172 = vector.broadcast %cst_25 : f32 to vector<8x192xf32>
    %173 = arith.addf %172, %171 : vector<8x192xf32>
    %174 = arith.divf %172, %173 : vector<8x192xf32>
    %175 = vector.extract_strided_slice %174 {offsets = [0, 0], sizes = [8, 64], strides = [1, 1]} : vector<8x192xf32> to vector<8x64xf32>
    %176 = vector.extract_strided_slice %174 {offsets = [0, 64], sizes = [8, 64], strides = [1, 1]} : vector<8x192xf32> to vector<8x64xf32>
    %177 = vector.extract_strided_slice %174 {offsets = [0, 128], sizes = [8, 64], strides = [1, 1]} : vector<8x192xf32> to vector<8x64xf32>
    %178 = vector.extract_strided_slice %168 {offsets = [0, 192], sizes = [8, 64], strides = [1, 1]} : vector<8x256xf32> to vector<8x64xf32>
    %179 = math.tanh %178 : vector<8x64xf32>
    %180 = arith.mulf %176, %164 : vector<8x64xf32>
    %181 = arith.mulf %175, %179 : vector<8x64xf32>
    %182 = arith.addf %180, %181 : vector<8x64xf32>
    %183 = math.tanh %182 : vector<8x64xf32>
    %184 = arith.mulf %177, %183 : vector<8x64xf32>
    %185 = arith.select %7, %58, %184 : vector<8x64xi1>, vector<8x64xf32>
    %186 = arith.select %7, %76, %166 : vector<8x64xi1>, vector<8x64xf32>
    %187 = arith.select %7, %94, %148 : vector<8x64xi1>, vector<8x64xf32>
    %188 = arith.select %7, %112, %130 : vector<8x64xi1>, vector<8x64xf32>
    %189 = arith.select %7, %130, %112 : vector<8x64xi1>, vector<8x64xf32>
    %190 = arith.select %7, %148, %94 : vector<8x64xi1>, vector<8x64xf32>
    %191 = arith.select %7, %166, %76 : vector<8x64xi1>, vector<8x64xf32>
    %192 = arith.select %7, %184, %58 : vector<8x64xi1>, vector<8x64xf32>
    %193 = tpu.concatenate %185, %186, %187, %188, %189, %190, %191, %192 in 0 : vector<8x64xf32>, vector<8x64xf32>, vector<8x64xf32>, vector<8x64xf32>, vector<8x64xf32>, vector<8x64xf32>, vector<8x64xf32>, vector<8x64xf32> -> vector<64x64xf32>
    %c0_26 = arith.constant 0 : index
    %c0_27 = arith.constant 0 : index
    %194 = vector.load %arg4[%c0_26, %c0_27] : memref<64x256xf32, #tpu.memory_space<vmem>>, vector<64x256xf32>
    %cst_28 = arith.constant dense<0.000000e+00> : vector<64x256xf32>
    %195 = tpu.matmul %193, %194, %cst_28 {dimension_numbers = #tpu.dot_dimension_numbers<[1], [0], [0], [1], [0, 0, 1, 1], [], []>} : vector<64x64xf32>, vector<64x256xf32>, vector<64x256xf32> -> vector<64x256xf32>
    %c0_29 = arith.constant 0 : index
    %c0_30 = arith.constant 0 : index
    %196 = vector.load %arg6[%c0_29, %c0_30] : memref<1x256xf32, #tpu.memory_space<vmem>>, vector<1x256xf32>
    %197 = vector.broadcast %196 : vector<1x256xf32> to vector<64x256xf32>
    %198 = arith.addf %195, %197 : vector<64x256xf32>
    %c0_31 = arith.constant 0 : index
    %c0_32 = arith.constant 0 : index
    %199 = vector.load %arg5[%c0_31, %c0_32] : memref<64x256xf32, #tpu.memory_space<vmem>>, vector<64x256xf32>
    %200 = vector.extract_strided_slice %198 {offsets = [56, 0], sizes = [8, 256], strides = [1, 1]} : vector<64x256xf32> to vector<8x256xf32>
    %201 = vector.extract_strided_slice %198 {offsets = [0, 0], sizes = [8, 256], strides = [1, 1]} : vector<64x256xf32> to vector<8x256xf32>
    %202 = arith.select %4, %200, %201 : vector<8x256xi1>, vector<8x256xf32>
    %203 = vector.extract_strided_slice %198 {offsets = [48, 0], sizes = [8, 256], strides = [1, 1]} : vector<64x256xf32> to vector<8x256xf32>
    %204 = vector.extract_strided_slice %198 {offsets = [8, 0], sizes = [8, 256], strides = [1, 1]} : vector<64x256xf32> to vector<8x256xf32>
    %205 = arith.select %4, %203, %204 : vector<8x256xi1>, vector<8x256xf32>
    %206 = vector.extract_strided_slice %198 {offsets = [40, 0], sizes = [8, 256], strides = [1, 1]} : vector<64x256xf32> to vector<8x256xf32>
    %207 = vector.extract_strided_slice %198 {offsets = [16, 0], sizes = [8, 256], strides = [1, 1]} : vector<64x256xf32> to vector<8x256xf32>
    %208 = arith.select %4, %206, %207 : vector<8x256xi1>, vector<8x256xf32>
    %209 = vector.extract_strided_slice %198 {offsets = [32, 0], sizes = [8, 256], strides = [1, 1]} : vector<64x256xf32> to vector<8x256xf32>
    %210 = vector.extract_strided_slice %198 {offsets = [24, 0], sizes = [8, 256], strides = [1, 1]} : vector<64x256xf32> to vector<8x256xf32>
    %211 = arith.select %4, %209, %210 : vector<8x256xi1>, vector<8x256xf32>
    %212 = vector.extract_strided_slice %198 {offsets = [24, 0], sizes = [8, 256], strides = [1, 1]} : vector<64x256xf32> to vector<8x256xf32>
    %213 = vector.extract_strided_slice %198 {offsets = [32, 0], sizes = [8, 256], strides = [1, 1]} : vector<64x256xf32> to vector<8x256xf32>
    %214 = arith.select %4, %212, %213 : vector<8x256xi1>, vector<8x256xf32>
    %215 = vector.extract_strided_slice %198 {offsets = [16, 0], sizes = [8, 256], strides = [1, 1]} : vector<64x256xf32> to vector<8x256xf32>
    %216 = vector.extract_strided_slice %198 {offsets = [40, 0], sizes = [8, 256], strides = [1, 1]} : vector<64x256xf32> to vector<8x256xf32>
    %217 = arith.select %4, %215, %216 : vector<8x256xi1>, vector<8x256xf32>
    %218 = vector.extract_strided_slice %198 {offsets = [8, 0], sizes = [8, 256], strides = [1, 1]} : vector<64x256xf32> to vector<8x256xf32>
    %219 = vector.extract_strided_slice %198 {offsets = [48, 0], sizes = [8, 256], strides = [1, 1]} : vector<64x256xf32> to vector<8x256xf32>
    %220 = arith.select %4, %218, %219 : vector<8x256xi1>, vector<8x256xf32>
    %221 = vector.extract_strided_slice %198 {offsets = [0, 0], sizes = [8, 256], strides = [1, 1]} : vector<64x256xf32> to vector<8x256xf32>
    %222 = vector.extract_strided_slice %198 {offsets = [56, 0], sizes = [8, 256], strides = [1, 1]} : vector<64x256xf32> to vector<8x256xf32>
    %223 = arith.select %4, %221, %222 : vector<8x256xi1>, vector<8x256xf32>
    %cst_33 = arith.constant 0.000000e+00 : f32
    %224 = vector.broadcast %cst_33 : f32 to vector<8x64xf32>
    %cst_34 = arith.constant 0.000000e+00 : f32
    %225 = vector.broadcast %cst_34 : f32 to vector<8x64xf32>
    %cst_35 = arith.constant dense<0.000000e+00> : vector<8x256xf32>
    %226 = tpu.matmul %224, %199, %cst_35 {dimension_numbers = #tpu.dot_dimension_numbers<[1], [0], [0], [1], [0, 0, 1, 1], [], []>} : vector<8x64xf32>, vector<64x256xf32>, vector<8x256xf32> -> vector<8x256xf32>
    %227 = arith.addf %202, %226 : vector<8x256xf32>
    %228 = vector.extract_strided_slice %227 {offsets = [0, 0], sizes = [8, 192], strides = [1, 1]} : vector<8x256xf32> to vector<8x192xf32>
    %229 = arith.negf %228 : vector<8x192xf32>
    %230 = math.exp %229 : vector<8x192xf32>
    %cst_36 = arith.constant 1.000000e+00 : f32
    %231 = vector.broadcast %cst_36 : f32 to vector<8x192xf32>
    %232 = arith.addf %231, %230 : vector<8x192xf32>
    %233 = arith.divf %231, %232 : vector<8x192xf32>
    %234 = vector.extract_strided_slice %233 {offsets = [0, 0], sizes = [8, 64], strides = [1, 1]} : vector<8x192xf32> to vector<8x64xf32>
    %235 = vector.extract_strided_slice %233 {offsets = [0, 64], sizes = [8, 64], strides = [1, 1]} : vector<8x192xf32> to vector<8x64xf32>
    %236 = vector.extract_strided_slice %233 {offsets = [0, 128], sizes = [8, 64], strides = [1, 1]} : vector<8x192xf32> to vector<8x64xf32>
    %237 = vector.extract_strided_slice %227 {offsets = [0, 192], sizes = [8, 64], strides = [1, 1]} : vector<8x256xf32> to vector<8x64xf32>
    %238 = math.tanh %237 : vector<8x64xf32>
    %239 = arith.mulf %235, %225 : vector<8x64xf32>
    %240 = arith.mulf %234, %238 : vector<8x64xf32>
    %241 = arith.addf %239, %240 : vector<8x64xf32>
    %242 = math.tanh %241 : vector<8x64xf32>
    %243 = arith.mulf %236, %242 : vector<8x64xf32>
    %cst_37 = arith.constant dense<0.000000e+00> : vector<8x256xf32>
    %244 = tpu.matmul %243, %199, %cst_37 {dimension_numbers = #tpu.dot_dimension_numbers<[1], [0], [0], [1], [0, 0, 1, 1], [], []>} : vector<8x64xf32>, vector<64x256xf32>, vector<8x256xf32> -> vector<8x256xf32>
    %245 = arith.addf %205, %244 : vector<8x256xf32>
    %246 = vector.extract_strided_slice %245 {offsets = [0, 0], sizes = [8, 192], strides = [1, 1]} : vector<8x256xf32> to vector<8x192xf32>
    %247 = arith.negf %246 : vector<8x192xf32>
    %248 = math.exp %247 : vector<8x192xf32>
    %cst_38 = arith.constant 1.000000e+00 : f32
    %249 = vector.broadcast %cst_38 : f32 to vector<8x192xf32>
    %250 = arith.addf %249, %248 : vector<8x192xf32>
    %251 = arith.divf %249, %250 : vector<8x192xf32>
    %252 = vector.extract_strided_slice %251 {offsets = [0, 0], sizes = [8, 64], strides = [1, 1]} : vector<8x192xf32> to vector<8x64xf32>
    %253 = vector.extract_strided_slice %251 {offsets = [0, 64], sizes = [8, 64], strides = [1, 1]} : vector<8x192xf32> to vector<8x64xf32>
    %254 = vector.extract_strided_slice %251 {offsets = [0, 128], sizes = [8, 64], strides = [1, 1]} : vector<8x192xf32> to vector<8x64xf32>
    %255 = vector.extract_strided_slice %245 {offsets = [0, 192], sizes = [8, 64], strides = [1, 1]} : vector<8x256xf32> to vector<8x64xf32>
    %256 = math.tanh %255 : vector<8x64xf32>
    %257 = arith.mulf %253, %241 : vector<8x64xf32>
    %258 = arith.mulf %252, %256 : vector<8x64xf32>
    %259 = arith.addf %257, %258 : vector<8x64xf32>
    %260 = math.tanh %259 : vector<8x64xf32>
    %261 = arith.mulf %254, %260 : vector<8x64xf32>
    %cst_39 = arith.constant dense<0.000000e+00> : vector<8x256xf32>
    %262 = tpu.matmul %261, %199, %cst_39 {dimension_numbers = #tpu.dot_dimension_numbers<[1], [0], [0], [1], [0, 0, 1, 1], [], []>} : vector<8x64xf32>, vector<64x256xf32>, vector<8x256xf32> -> vector<8x256xf32>
    %263 = arith.addf %208, %262 : vector<8x256xf32>
    %264 = vector.extract_strided_slice %263 {offsets = [0, 0], sizes = [8, 192], strides = [1, 1]} : vector<8x256xf32> to vector<8x192xf32>
    %265 = arith.negf %264 : vector<8x192xf32>
    %266 = math.exp %265 : vector<8x192xf32>
    %cst_40 = arith.constant 1.000000e+00 : f32
    %267 = vector.broadcast %cst_40 : f32 to vector<8x192xf32>
    %268 = arith.addf %267, %266 : vector<8x192xf32>
    %269 = arith.divf %267, %268 : vector<8x192xf32>
    %270 = vector.extract_strided_slice %269 {offsets = [0, 0], sizes = [8, 64], strides = [1, 1]} : vector<8x192xf32> to vector<8x64xf32>
    %271 = vector.extract_strided_slice %269 {offsets = [0, 64], sizes = [8, 64], strides = [1, 1]} : vector<8x192xf32> to vector<8x64xf32>
    %272 = vector.extract_strided_slice %269 {offsets = [0, 128], sizes = [8, 64], strides = [1, 1]} : vector<8x192xf32> to vector<8x64xf32>
    %273 = vector.extract_strided_slice %263 {offsets = [0, 192], sizes = [8, 64], strides = [1, 1]} : vector<8x256xf32> to vector<8x64xf32>
    %274 = math.tanh %273 : vector<8x64xf32>
    %275 = arith.mulf %271, %259 : vector<8x64xf32>
    %276 = arith.mulf %270, %274 : vector<8x64xf32>
    %277 = arith.addf %275, %276 : vector<8x64xf32>
    %278 = math.tanh %277 : vector<8x64xf32>
    %279 = arith.mulf %272, %278 : vector<8x64xf32>
    %cst_41 = arith.constant dense<0.000000e+00> : vector<8x256xf32>
    %280 = tpu.matmul %279, %199, %cst_41 {dimension_numbers = #tpu.dot_dimension_numbers<[1], [0], [0], [1], [0, 0, 1, 1], [], []>} : vector<8x64xf32>, vector<64x256xf32>, vector<8x256xf32> -> vector<8x256xf32>
    %281 = arith.addf %211, %280 : vector<8x256xf32>
    %282 = vector.extract_strided_slice %281 {offsets = [0, 0], sizes = [8, 192], strides = [1, 1]} : vector<8x256xf32> to vector<8x192xf32>
    %283 = arith.negf %282 : vector<8x192xf32>
    %284 = math.exp %283 : vector<8x192xf32>
    %cst_42 = arith.constant 1.000000e+00 : f32
    %285 = vector.broadcast %cst_42 : f32 to vector<8x192xf32>
    %286 = arith.addf %285, %284 : vector<8x192xf32>
    %287 = arith.divf %285, %286 : vector<8x192xf32>
    %288 = vector.extract_strided_slice %287 {offsets = [0, 0], sizes = [8, 64], strides = [1, 1]} : vector<8x192xf32> to vector<8x64xf32>
    %289 = vector.extract_strided_slice %287 {offsets = [0, 64], sizes = [8, 64], strides = [1, 1]} : vector<8x192xf32> to vector<8x64xf32>
    %290 = vector.extract_strided_slice %287 {offsets = [0, 128], sizes = [8, 64], strides = [1, 1]} : vector<8x192xf32> to vector<8x64xf32>
    %291 = vector.extract_strided_slice %281 {offsets = [0, 192], sizes = [8, 64], strides = [1, 1]} : vector<8x256xf32> to vector<8x64xf32>
    %292 = math.tanh %291 : vector<8x64xf32>
    %293 = arith.mulf %289, %277 : vector<8x64xf32>
    %294 = arith.mulf %288, %292 : vector<8x64xf32>
    %295 = arith.addf %293, %294 : vector<8x64xf32>
    %296 = math.tanh %295 : vector<8x64xf32>
    %297 = arith.mulf %290, %296 : vector<8x64xf32>
    %cst_43 = arith.constant dense<0.000000e+00> : vector<8x256xf32>
    %298 = tpu.matmul %297, %199, %cst_43 {dimension_numbers = #tpu.dot_dimension_numbers<[1], [0], [0], [1], [0, 0, 1, 1], [], []>} : vector<8x64xf32>, vector<64x256xf32>, vector<8x256xf32> -> vector<8x256xf32>
    %299 = arith.addf %214, %298 : vector<8x256xf32>
    %300 = vector.extract_strided_slice %299 {offsets = [0, 0], sizes = [8, 192], strides = [1, 1]} : vector<8x256xf32> to vector<8x192xf32>
    %301 = arith.negf %300 : vector<8x192xf32>
    %302 = math.exp %301 : vector<8x192xf32>
    %cst_44 = arith.constant 1.000000e+00 : f32
    %303 = vector.broadcast %cst_44 : f32 to vector<8x192xf32>
    %304 = arith.addf %303, %302 : vector<8x192xf32>
    %305 = arith.divf %303, %304 : vector<8x192xf32>
    %306 = vector.extract_strided_slice %305 {offsets = [0, 0], sizes = [8, 64], strides = [1, 1]} : vector<8x192xf32> to vector<8x64xf32>
    %307 = vector.extract_strided_slice %305 {offsets = [0, 64], sizes = [8, 64], strides = [1, 1]} : vector<8x192xf32> to vector<8x64xf32>
    %308 = vector.extract_strided_slice %305 {offsets = [0, 128], sizes = [8, 64], strides = [1, 1]} : vector<8x192xf32> to vector<8x64xf32>
    %309 = vector.extract_strided_slice %299 {offsets = [0, 192], sizes = [8, 64], strides = [1, 1]} : vector<8x256xf32> to vector<8x64xf32>
    %310 = math.tanh %309 : vector<8x64xf32>
    %311 = arith.mulf %307, %295 : vector<8x64xf32>
    %312 = arith.mulf %306, %310 : vector<8x64xf32>
    %313 = arith.addf %311, %312 : vector<8x64xf32>
    %314 = math.tanh %313 : vector<8x64xf32>
    %315 = arith.mulf %308, %314 : vector<8x64xf32>
    %cst_45 = arith.constant dense<0.000000e+00> : vector<8x256xf32>
    %316 = tpu.matmul %315, %199, %cst_45 {dimension_numbers = #tpu.dot_dimension_numbers<[1], [0], [0], [1], [0, 0, 1, 1], [], []>} : vector<8x64xf32>, vector<64x256xf32>, vector<8x256xf32> -> vector<8x256xf32>
    %317 = arith.addf %217, %316 : vector<8x256xf32>
    %318 = vector.extract_strided_slice %317 {offsets = [0, 0], sizes = [8, 192], strides = [1, 1]} : vector<8x256xf32> to vector<8x192xf32>
    %319 = arith.negf %318 : vector<8x192xf32>
    %320 = math.exp %319 : vector<8x192xf32>
    %cst_46 = arith.constant 1.000000e+00 : f32
    %321 = vector.broadcast %cst_46 : f32 to vector<8x192xf32>
    %322 = arith.addf %321, %320 : vector<8x192xf32>
    %323 = arith.divf %321, %322 : vector<8x192xf32>
    %324 = vector.extract_strided_slice %323 {offsets = [0, 0], sizes = [8, 64], strides = [1, 1]} : vector<8x192xf32> to vector<8x64xf32>
    %325 = vector.extract_strided_slice %323 {offsets = [0, 64], sizes = [8, 64], strides = [1, 1]} : vector<8x192xf32> to vector<8x64xf32>
    %326 = vector.extract_strided_slice %323 {offsets = [0, 128], sizes = [8, 64], strides = [1, 1]} : vector<8x192xf32> to vector<8x64xf32>
    %327 = vector.extract_strided_slice %317 {offsets = [0, 192], sizes = [8, 64], strides = [1, 1]} : vector<8x256xf32> to vector<8x64xf32>
    %328 = math.tanh %327 : vector<8x64xf32>
    %329 = arith.mulf %325, %313 : vector<8x64xf32>
    %330 = arith.mulf %324, %328 : vector<8x64xf32>
    %331 = arith.addf %329, %330 : vector<8x64xf32>
    %332 = math.tanh %331 : vector<8x64xf32>
    %333 = arith.mulf %326, %332 : vector<8x64xf32>
    %cst_47 = arith.constant dense<0.000000e+00> : vector<8x256xf32>
    %334 = tpu.matmul %333, %199, %cst_47 {dimension_numbers = #tpu.dot_dimension_numbers<[1], [0], [0], [1], [0, 0, 1, 1], [], []>} : vector<8x64xf32>, vector<64x256xf32>, vector<8x256xf32> -> vector<8x256xf32>
    %335 = arith.addf %220, %334 : vector<8x256xf32>
    %336 = vector.extract_strided_slice %335 {offsets = [0, 0], sizes = [8, 192], strides = [1, 1]} : vector<8x256xf32> to vector<8x192xf32>
    %337 = arith.negf %336 : vector<8x192xf32>
    %338 = math.exp %337 : vector<8x192xf32>
    %cst_48 = arith.constant 1.000000e+00 : f32
    %339 = vector.broadcast %cst_48 : f32 to vector<8x192xf32>
    %340 = arith.addf %339, %338 : vector<8x192xf32>
    %341 = arith.divf %339, %340 : vector<8x192xf32>
    %342 = vector.extract_strided_slice %341 {offsets = [0, 0], sizes = [8, 64], strides = [1, 1]} : vector<8x192xf32> to vector<8x64xf32>
    %343 = vector.extract_strided_slice %341 {offsets = [0, 64], sizes = [8, 64], strides = [1, 1]} : vector<8x192xf32> to vector<8x64xf32>
    %344 = vector.extract_strided_slice %341 {offsets = [0, 128], sizes = [8, 64], strides = [1, 1]} : vector<8x192xf32> to vector<8x64xf32>
    %345 = vector.extract_strided_slice %335 {offsets = [0, 192], sizes = [8, 64], strides = [1, 1]} : vector<8x256xf32> to vector<8x64xf32>
    %346 = math.tanh %345 : vector<8x64xf32>
    %347 = arith.mulf %343, %331 : vector<8x64xf32>
    %348 = arith.mulf %342, %346 : vector<8x64xf32>
    %349 = arith.addf %347, %348 : vector<8x64xf32>
    %350 = math.tanh %349 : vector<8x64xf32>
    %351 = arith.mulf %344, %350 : vector<8x64xf32>
    %cst_49 = arith.constant dense<0.000000e+00> : vector<8x256xf32>
    %352 = tpu.matmul %351, %199, %cst_49 {dimension_numbers = #tpu.dot_dimension_numbers<[1], [0], [0], [1], [0, 0, 1, 1], [], []>} : vector<8x64xf32>, vector<64x256xf32>, vector<8x256xf32> -> vector<8x256xf32>
    %353 = arith.addf %223, %352 : vector<8x256xf32>
    %354 = vector.extract_strided_slice %353 {offsets = [0, 0], sizes = [8, 192], strides = [1, 1]} : vector<8x256xf32> to vector<8x192xf32>
    %355 = arith.negf %354 : vector<8x192xf32>
    %356 = math.exp %355 : vector<8x192xf32>
    %cst_50 = arith.constant 1.000000e+00 : f32
    %357 = vector.broadcast %cst_50 : f32 to vector<8x192xf32>
    %358 = arith.addf %357, %356 : vector<8x192xf32>
    %359 = arith.divf %357, %358 : vector<8x192xf32>
    %360 = vector.extract_strided_slice %359 {offsets = [0, 0], sizes = [8, 64], strides = [1, 1]} : vector<8x192xf32> to vector<8x64xf32>
    %361 = vector.extract_strided_slice %359 {offsets = [0, 64], sizes = [8, 64], strides = [1, 1]} : vector<8x192xf32> to vector<8x64xf32>
    %362 = vector.extract_strided_slice %359 {offsets = [0, 128], sizes = [8, 64], strides = [1, 1]} : vector<8x192xf32> to vector<8x64xf32>
    %363 = vector.extract_strided_slice %353 {offsets = [0, 192], sizes = [8, 64], strides = [1, 1]} : vector<8x256xf32> to vector<8x64xf32>
    %364 = math.tanh %363 : vector<8x64xf32>
    %365 = arith.mulf %361, %349 : vector<8x64xf32>
    %366 = arith.mulf %360, %364 : vector<8x64xf32>
    %367 = arith.addf %365, %366 : vector<8x64xf32>
    %368 = math.tanh %367 : vector<8x64xf32>
    %369 = arith.mulf %362, %368 : vector<8x64xf32>
    %c0_51 = arith.constant 0 : index
    %c0_52 = arith.constant 0 : index
    %370 = vector.load %arg7[%c0_51, %c0_52] : memref<64x32xf32, #tpu.memory_space<vmem>>, vector<64x32xf32>
    %cst_53 = arith.constant dense<0.000000e+00> : vector<8x32xf32>
    %371 = tpu.matmul %369, %370, %cst_53 {dimension_numbers = #tpu.dot_dimension_numbers<[1], [0], [0], [1], [0, 0, 1, 1], [], []>} : vector<8x64xf32>, vector<64x32xf32>, vector<8x32xf32> -> vector<8x32xf32>
    %c0_54 = arith.constant 0 : index
    %c0_55 = arith.constant 0 : index
    %372 = vector.load %arg8[%c0_54, %c0_55] : memref<1x32xf32, #tpu.memory_space<vmem>>, vector<1x32xf32>
    %373 = vector.broadcast %372 : vector<1x32xf32> to vector<8x32xf32>
    %374 = arith.addf %371, %373 : vector<8x32xf32>
    %c0_56 = arith.constant 0 : index
    %c0_57 = arith.constant 0 : index
    %375 = vector.load %arg9[%c0_56, %c0_57] : memref<8x32xf32, #tpu.memory_space<vmem>>, vector<8x32xf32>
    tpu.vector_store %arg9[%c0_56, %c0_57], %374 {strides = array<i32>} : memref<8x32xf32, #tpu.memory_space<vmem>>, vector<8x32xf32>,
    return
  }
}

</mosaic_0001>

<llo_original>
// kernel: encoder_forward.1
$region0: #{encoder_forward.1}
  #allocation0 [shape = 'u32[]', space=smem, size = 0x4, offset = 0x4, fixed_abs, tag = 'smem constant byte address 0x4 - core index']
  #allocation1 [shape = 'u32[144,128]{1,0:T(1,128)}', space=vmem, size = 0x12000, scoped, tag = 'internal scratch']
  %s0 = inlined_call_operand.vmem [shape: f32[64,32], index: 0, kind: input, shape index: {}]
  %s1 = inlined_call_operand.hbm [shape: f32[32,256], index: 1, kind: input, shape index: {}]
  %s2 = inlined_call_operand.vmem [shape: f32[64,256], index: 2, kind: input, shape index: {}]
  %s3 = inlined_call_operand.vmem [shape: f32[1,256], index: 3, kind: input, shape index: {}]
  %s4 = inlined_call_operand.vmem [shape: f32[64,256], index: 4, kind: input, shape index: {}]
  %s5 = inlined_call_operand.hbm [shape: f32[64,256], index: 5, kind: input, shape index: {}]
  %s6 = inlined_call_operand.vmem [shape: f32[1,256], index: 6, kind: input, shape index: {}]
  %s7 = inlined_call_operand.vmem [shape: f32[64,32], index: 7, kind: input, shape index: {}]
  %s8 = inlined_call_operand.vmem [shape: f32[1,32], index: 8, kind: input, shape index: {}]
  %s9 = inlined_call_operand.vmem [shape: f32[8,32], index: 9, kind: output, shape index: {}]
  %s10 = sld [smem:[#allocation0]]
  $region54: #{encoder_forward.1} parent=0
    _
  %s12 = ssub.s32 1, %s10
  %s13 = scalar_select 0, %s12, %s10
  $region1: #{encoder_forward.1} parent=0
    #allocation2 [shape = 'u8[32768]{0}', space=vmem, size = 0x8000, scoped, tag = 'input window, operand 1, single buffered']
    #allocation3 [shape = 's32[1]{0}', space=sflag, size = 0x4, scoped, tag = 'scoped memory for encoder_forward.1']
    #allocation4 [shape = 'u8[65536]{0}', space=vmem, size = 0x10000, scoped, tag = 'input window, operand 5, single buffered']
    #allocation5 [shape = 's32[1]{0}', space=sflag, size = 0x4, scoped, tag = 'scoped memory for encoder_forward.1']
    %14 = vsyncpa [#allocation3], 0
    %15 = vsyncpa [#allocation5], 0
    // Predicated region
    $region2: #{encoder_forward.1} parent=1 // pred_check
      _
    $region3: #{encoder_forward.1} parent=1 // pred_check_branch
      %17 = sbr.rel (0) target = $region5
    $region4: #{encoder_forward.1} parent=1 // pred_region
      _
    $region5: #{encoder_forward.1} parent=1 // pred_fallthru
      _
    // Predicated region
    $region6: #{encoder_forward.1} parent=1 // pred_check
      _
    $region7: #{encoder_forward.1} parent=1 // pred_check_branch
      %19 = sbr.rel (0) target = $region9
    $region8: #{encoder_forward.1} parent=1 // pred_region
      %s21 = ssub.s32 1024, 1024
      %22 = vsyncadd [#allocation3], %s21
      %s23 = sshll.u32 [#allocation2], 4
      %s24 = int_to_ptr.vmem [resolvable:$true] %s23
      %29 = dma.hbm_to_vmem [thread:$0]  %s1, 1024, %s24, [#allocation3], 256, 256, 16
    $region9: #{encoder_forward.1} parent=1 // pred_fallthru
      _
    // Predicated region
    $region10: #{encoder_forward.1} parent=1 // pred_check
      _
    $region11: #{encoder_forward.1} parent=1 // pred_check_branch
      %31 = sbr.rel (0) target = $region13
    $region12: #{encoder_forward.1} parent=1 // pred_region
      _
    $region13: #{encoder_forward.1} parent=1 // pred_fallthru
      _
    // Predicated region
    $region14: #{encoder_forward.1} parent=1 // pred_check
      _
    $region15: #{encoder_forward.1} parent=1 // pred_check_branch
      %33 = sbr.rel (0) target = $region17
    $region16: #{encoder_forward.1} parent=1 // pred_region
      _
    $region17: #{encoder_forward.1} parent=1 // pred_fallthru
      _
    // Predicated region
    $region18: #{encoder_forward.1} parent=1 // pred_check
      _
    $region19: #{encoder_forward.1} parent=1 // pred_check_branch
      %35 = sbr.rel (0) target = $region21
    $region20: #{encoder_forward.1} parent=1 // pred_region
      _
    $region21: #{encoder_forward.1} parent=1 // pred_fallthru
      _
    // Predicated region
    $region22: #{encoder_forward.1} parent=1 // pred_check
      _
    $region23: #{encoder_forward.1} parent=1 // pred_check_branch
      %37 = sbr.rel (0) target = $region25
    $region24: #{encoder_forward.1} parent=1 // pred_region
      %s39 = ssub.s32 2048, 2048
      %40 = vsyncadd [#allocation5], %s39
      %s41 = sshll.u32 [#allocation4], 4
      %s42 = int_to_ptr.vmem [resolvable:$true] %s41
      %47 = dma.hbm_to_vmem [thread:$0]  %s5, 2048, %s42, [#allocation5], 256, 256, 16
    $region25: #{encoder_forward.1} parent=1 // pred_fallthru
      _
    // Predicated region
    $region26: #{encoder_forward.1} parent=1 // pred_check
      _
    $region27: #{encoder_forward.1} parent=1 // pred_check_branch
      %49 = sbr.rel (0) target = $region29
    $region28: #{encoder_forward.1} parent=1 // pred_region
      _
    $region29: #{encoder_forward.1} parent=1 // pred_fallthru
      _
    // Predicated region
    $region30: #{encoder_forward.1} parent=1 // pred_check
      _
    $region31: #{encoder_forward.1} parent=1 // pred_check_branch
      %51 = sbr.rel (0) target = $region33
    $region32: #{encoder_forward.1} parent=1 // pred_region
      _
    $region33: #{encoder_forward.1} parent=1 // pred_fallthru
      _
    // Predicated region
    $region34: #{encoder_forward.1} parent=1 // pred_check
      _
    $region35: #{encoder_forward.1} parent=1 // pred_check_branch
      %53 = sbr.rel (0) target = $region37
    $region36: #{encoder_forward.1} parent=1 // pred_region
      _
    $region37: #{encoder_forward.1} parent=1 // pred_fallthru
      _
    // Predicated region
    $region38: #{encoder_forward.1} parent=1 // pred_check
      _
    $region39: #{encoder_forward.1} parent=1 // pred_check_branch
      %55 = sbr.rel (0) target = $region41
    $region40: #{encoder_forward.1} parent=1 // pred_region
      %56 = dma.done [#allocation3], 1024
    $region41: #{encoder_forward.1} parent=1 // pred_fallthru
      _
    // Predicated region
    $region42: #{encoder_forward.1} parent=1 // pred_check
      _
    $region43: #{encoder_forward.1} parent=1 // pred_check_branch
      %58 = sbr.rel (0) target = $region45
    $region44: #{encoder_forward.1} parent=1 // pred_region
      %59 = dma.done [#allocation5], 2048
    $region45: #{encoder_forward.1} parent=1 // pred_fallthru
      _
    %v60 = vlaneseq
    %v61 = vand.u32 %v60, 127
    %v62 = vadd.s32 %v61, 128
    %v63 = vand.u32 %v61, 32
    %v64 = vand.u32 %v62, 32
    %vm65 = vcmp.ne.s32.totalorder %v63, 0
    %vm66 = vcmp.ne.s32.totalorder %v64, 0
    %vm67 = vcmp.lt.s32.totalorder %v61, 32
    %v68 = vld [vmem:[%s0] sm:$0xff]
    %v69 = vld [vmem:[%s0 + $0x8] sm:$0xff]
    %v70 = vld [vmem:[%s0 + $0x10] sm:$0xff]
    %v71 = vld [vmem:[%s0 + $0x18] sm:$0xff]
    %v72 = vld [vmem:[%s0 + $0x20] sm:$0xff]
    %v73 = vld [vmem:[%s0 + $0x28] sm:$0xff]
    %v74 = vld [vmem:[%s0 + $0x30] sm:$0xff]
    %v75 = vld [vmem:[%s0 + $0x38] sm:$0xff]
    %v76 = vld [vmem:[#allocation2] sm:$0xff]
    %v77 = vld [vmem:[#allocation2 + $0x8] sm:$0xff]
    %v78 = vld [vmem:[#allocation2 + $0x10] sm:$0xff]
    %v79 = vld [vmem:[#allocation2 + $0x18] sm:$0xff]
    %v80 = vld [vmem:[#allocation2 + $0x20] sm:$0xff]
    %v81 = vld [vmem:[#allocation2 + $0x28] sm:$0xff]
    %v82 = vld [vmem:[#allocation2 + $0x30] sm:$0xff]
    %v83 = vld [vmem:[#allocation2 + $0x38] sm:$0xff]
    %v84 = vld [vmem:[%s3] sm:$0x3]
    %v86 = vlaneseq
    %v87 = vshrl.u32 %v86, 7
    %v88 = vsub.s32 0, %v87
    %v89 = vrot.slane %v84, %v88
    %v90 = vlaneseq
    %v91 = vshrl.u32 %v90, 7
    %v92 = vsub.s32 1, %v91
    %v93 = vrot.slane %v84, %v92
    %vm96 = vcmask 261120
    %v98 = vsel %vm96, %v68, 0
    %v101 = vsel %vm96, %v69, 0
    %v104 = vsel %vm96, %v70, 0
    %v107 = vsel %vm96, %v71, 0
    %v110 = vsel %vm96, %v72, 0
    %v113 = vsel %vm96, %v73, 0
    %v116 = vsel %vm96, %v74, 0
    %v119 = vsel %vm96, %v75, 0
    %121 = vmatprep.subr.mxu0 0.0
    %122 = vmatpush1.msra.mxu0 0.0
    %123 = vmatprep.subr.mxu0 0.0
    %124 = vmatpush1.msra.mxu0 0.0
    %125 = vmatprep.subr.mxu0 0.0
    %126 = vmatpush1.msra.mxu0 0.0
    %127 = vmatprep.subr.mxu0 0.0
    %128 = vmatpush1.msra.mxu0 0.0
    %129 = vmatprep.subr.mxu0 0.0
    %130 = vmatpush1.msra.mxu0 0.0
    %131 = vmatprep.subr.mxu0 0.0
    %132 = vmatpush1.msra.mxu0 0.0
    %133 = vmatprep.subr.mxu0 0.0
    %134 = vmatpush1.msra.mxu0 0.0
    %135 = vmatprep.subr.mxu0 0.0
    %136 = vmatpush1.msra.mxu0 0.0
    %137 = vmatprep.subr.mxu0 0.0
    %138 = vmatpush1.msra.mxu0 0.0
    %139 = vmatprep.subr.mxu0 0.0
    %140 = vmatpush1.msra.mxu0 0.0
    %141 = vmatprep.subr.mxu0 0.0
    %142 = vmatpush1.msra.mxu0 0.0
    %143 = vmatprep.subr.mxu0 0.0
    %144 = vmatpush1.msra.mxu0 0.0
    %145 = vmatprep.subr.mxu0 %v83
    %146 = vmatpush1.msra.mxu0 %v82
    %147 = vmatprep.subr.mxu0 %v81
    %148 = vmatpush1.msra.mxu0 %v80
    %149 = vmatprep.subr.mxu0 %v79
    %150 = vmatpush1.msra.mxu0 %v78
    %151 = vmatprep.subr.mxu0 %v77
    %152 = vmatpush1.msra.mxu0 %v76
    %153 = vmatprep.subr.mxu0 0.0
    %154 = vmatpush2.msra.mxu0 0.0
    %155 = vmatprep.subr.mxu0 0.0
    %156 = vmatpush2.msra.mxu0 0.0
    %157 = vmatprep.subr.mxu0 0.0
    %158 = vmatpush2.msra.mxu0 0.0
    %159 = vmatprep.subr.mxu0 0.0
    %160 = vmatpush2.msra.mxu0 0.0
    %161 = vmatprep.subr.mxu0 0.0
    %162 = vmatpush2.msra.mxu0 0.0
    %163 = vmatprep.subr.mxu0 0.0
    %164 = vmatpush2.msra.mxu0 0.0
    %165 = vmatprep.subr.mxu0 0.0
    %166 = vmatpush2.msra.mxu0 0.0
    %167 = vmatprep.subr.mxu0 0.0
    %168 = vmatpush2.msra.mxu0 0.0
    %169 = vmatprep.subr.mxu0 0.0
    %170 = vmatpush2.msra.mxu0 0.0
    %171 = vmatprep.subr.mxu0 0.0
    %172 = vmatpush2.msra.mxu0 0.0
    %173 = vmatprep.subr.mxu0 0.0
    %174 = vmatpush2.msra.mxu0 0.0
    %175 = vmatprep.subr.mxu0 0.0
    %176 = vmatpush2.msra.mxu0 0.0
    %177 = vmatprep.subr.mxu0 0.0
    %178 = vmatpush2.msra.mxu0 0.0
    %179 = vmatprep.subr.mxu0 0.0
    %180 = vmatpush2.msra.mxu0 0.0
    %181 = vmatprep.subr.mxu0 0.0
    %182 = vmatpush2.msra.mxu0 0.0
    %183 = vmatprep.subr.mxu0 0.0
    %184 = vmatpush2.msra.mxu0 0.0
    %185 = vmatprep.mubr.f32.mxu0 0.0
    %186 = vmatmul.mubr.f32.gmra.mxu0 %v98
    %v187 = vpop.f32.mrf.mxu0
    %v188 = vadd.f32 %v89, %v187
    %v189 = vpop.f32.mrf.mxu0
    %v190 = vadd.f32 %v93, %v189
    %191 = vmatprep.mubr.f32.mxu0 0.0
    %192 = vmatmul.mubr.f32.gmra.mxu0 %v101
    %v193 = vpop.f32.mrf.mxu0
    %v194 = vadd.f32 %v89, %v193
    %v195 = vpop.f32.mrf.mxu0
    %v196 = vadd.f32 %v93, %v195
    %197 = vmatprep.mubr.f32.mxu0 0.0
    %198 = vmatmul.mubr.f32.gmra.mxu0 %v104
    %v199 = vpop.f32.mrf.mxu0
    %v200 = vadd.f32 %v89, %v199
    %v201 = vpop.f32.mrf.mxu0
    %v202 = vadd.f32 %v93, %v201
    %203 = vmatprep.mubr.f32.mxu0 0.0
    %204 = vmatmul.mubr.f32.gmra.mxu0 %v107
    %v205 = vpop.f32.mrf.mxu0
    %v206 = vadd.f32 %v89, %v205
    %v207 = vpop.f32.mrf.mxu0
    %v208 = vadd.f32 %v93, %v207
    %209 = vmatprep.mubr.f32.mxu0 0.0
    %210 = vmatmul.mubr.f32.gmra.mxu0 %v110
    %v211 = vpop.f32.mrf.mxu0
    %v212 = vadd.f32 %v89, %v211
    %v213 = vpop.f32.mrf.mxu0
    %v214 = vadd.f32 %v93, %v213
    %215 = vmatprep.mubr.f32.mxu0 0.0
    %216 = vmatmul.mubr.f32.gmra.mxu0 %v113
    %v217 = vpop.f32.mrf.mxu0
    %v218 = vadd.f32 %v89, %v217
    %v219 = vpop.f32.mrf.mxu0
    %v220 = vadd.f32 %v93, %v219
    %221 = vmatprep.mubr.f32.mxu0 0.0
    %222 = vmatmul.mubr.f32.gmra.mxu0 %v116
    %v223 = vpop.f32.mrf.mxu0
    %v224 = vadd.f32 %v89, %v223
    %v225 = vpop.f32.mrf.mxu0
    %v226 = vadd.f32 %v93, %v225
    %227 = vmatprep.mubr.f32.mxu0 0.0
    %228 = vmatmul.mubr.f32.gmra.mxu0 %v119
    %v229 = vpop.f32.mrf.mxu0
    %v230 = vadd.f32 %v89, %v229
    %v231 = vpop.f32.mrf.mxu0
    %v232 = vadd.f32 %v93, %v231
    %233 = vdwg.mxu0
    %v234 = vld [vmem:[%s2] sm:$0xff]
    %v235 = vld [vmem:[%s2 + $0x8] sm:$0xff]
    %v236 = vld [vmem:[%s2 + $0x10] sm:$0xff]
    %v237 = vld [vmem:[%s2 + $0x18] sm:$0xff]
    %v238 = vld [vmem:[%s2 + $0x20] sm:$0xff]
    %v239 = vld [vmem:[%s2 + $0x28] sm:$0xff]
    %v240 = vld [vmem:[%s2 + $0x30] sm:$0xff]
    %v241 = vld [vmem:[%s2 + $0x38] sm:$0xff]
    %v242 = vld [vmem:[%s2 + $0x40] sm:$0xff]
    %v243 = vld [vmem:[%s2 + $0x48] sm:$0xff]
    %v244 = vld [vmem:[%s2 + $0x50] sm:$0xff]
    %v245 = vld [vmem:[%s2 + $0x58] sm:$0xff]
    %v246 = vld [vmem:[%s2 + $0x60] sm:$0xff]
    %v247 = vld [vmem:[%s2 + $0x68] sm:$0xff]
    %v248 = vld [vmem:[%s2 + $0x70] sm:$0xff]
    %v249 = vld [vmem:[%s2 + $0x78] sm:$0xff]
    %v250 = vsel %vm65, %v230, %v188
    %v251 = vsel %vm66, %v232, %v190
    %v252 = vsel %vm65, %v224, %v194
    %v253 = vsel %vm66, %v226, %v196
    %v254 = vsel %vm65, %v218, %v200
    %v255 = vsel %vm66, %v220, %v202
    %v256 = vsel %vm65, %v212, %v206
    %v257 = vsel %vm66, %v214, %v208
    %v258 = vsel %vm65, %v206, %v212
    %v259 = vsel %vm66, %v208, %v214
    %v260 = vsel %vm65, %v200, %v218
    %v261 = vsel %vm66, %v202, %v220
    %v262 = vsel %vm65, %v194, %v224
    %v263 = vsel %vm66, %v196, %v226
    %v264 = vsel %vm65, %v188, %v230
    %v265 = vsel %vm66, %v190, %v232
    %vm266 = vcmask 523264
    %v268 = vsel %vm266, 0.0, 0
    %270 = vmatprep.subr.mxu0 0.0
    %271 = vmatpush1.msra.mxu0 0.0
    %272 = vmatprep.subr.mxu0 0.0
    %273 = vmatpush1.msra.mxu0 0.0
    %274 = vmatprep.subr.mxu0 0.0
    %275 = vmatpush1.msra.mxu0 0.0
    %276 = vmatprep.subr.mxu0 0.0
    %277 = vmatpush1.msra.mxu0 0.0
    %278 = vmatprep.subr.mxu0 0.0
    %279 = vmatpush1.msra.mxu0 0.0
    %280 = vmatprep.subr.mxu0 0.0
    %281 = vmatpush1.msra.mxu0 0.0
    %282 = vmatprep.subr.mxu0 0.0
    %283 = vmatpush1.msra.mxu0 0.0
    %284 = vmatprep.subr.mxu0 0.0
    %285 = vmatpush1.msra.mxu0 0.0
    %286 = vmatprep.subr.mxu0 %v249
    %287 = vmatpush1.msra.mxu0 %v248
    %288 = vmatprep.subr.mxu0 %v247
    %289 = vmatpush1.msra.mxu0 %v246
    %290 = vmatprep.subr.mxu0 %v245
    %291 = vmatpush1.msra.mxu0 %v244
    %292 = vmatprep.subr.mxu0 %v243
    %293 = vmatpush1.msra.mxu0 %v242
    %294 = vmatprep.subr.mxu0 %v241
    %295 = vmatpush1.msra.mxu0 %v240
    %296 = vmatprep.subr.mxu0 %v239
    %297 = vmatpush1.msra.mxu0 %v238
    %298 = vmatprep.subr.mxu0 %v237
    %299 = vmatpush1.msra.mxu0 %v236
    %300 = vmatprep.subr.mxu0 %v235
    %301 = vmatpush1.msra.mxu0 %v234
    %302 = vmatprep.subr.mxu0 0.0
    %303 = vmatpush2.msra.mxu0 0.0
    %304 = vmatprep.subr.mxu0 0.0
    %305 = vmatpush2.msra.mxu0 0.0
    %306 = vmatprep.subr.mxu0 0.0
    %307 = vmatpush2.msra.mxu0 0.0
    %308 = vmatprep.subr.mxu0 0.0
    %309 = vmatpush2.msra.mxu0 0.0
    %310 = vmatprep.subr.mxu0 0.0
    %311 = vmatpush2.msra.mxu0 0.0
    %312 = vmatprep.subr.mxu0 0.0
    %313 = vmatpush2.msra.mxu0 0.0
    %314 = vmatprep.subr.mxu0 0.0
    %315 = vmatpush2.msra.mxu0 0.0
    %316 = vmatprep.subr.mxu0 0.0
    %317 = vmatpush2.msra.mxu0 0.0
    %318 = vmatprep.subr.mxu0 0.0
    %319 = vmatpush2.msra.mxu0 0.0
    %320 = vmatprep.subr.mxu0 0.0
    %321 = vmatpush2.msra.mxu0 0.0
    %322 = vmatprep.subr.mxu0 0.0
    %323 = vmatpush2.msra.mxu0 0.0
    %324 = vmatprep.subr.mxu0 0.0
    %325 = vmatpush2.msra.mxu0 0.0
    %326 = vmatprep.subr.mxu0 0.0
    %327 = vmatpush2.msra.mxu0 0.0
    %328 = vmatprep.subr.mxu0 0.0
    %329 = vmatpush2.msra.mxu0 0.0
    %330 = vmatprep.subr.mxu0 0.0
    %331 = vmatpush2.msra.mxu0 0.0
    %332 = vmatprep.subr.mxu0 0.0
    %333 = vmatpush2.msra.mxu0 0.0
    %334 = vmatprep.mubr.f32.mxu0 0.0
    %335 = vmatmul.mubr.f32.gmra.mxu0 %v268
    %v336 = vpop.f32.mrf.mxu0
    %v337 = vadd.f32 0.0, %v336
    %v338 = vpop.f32.mrf.mxu0
    %v339 = vadd.f32 0.0, %v338
    %340 = vdwg.mxu0
    %v341 = vadd.f32 %v250, %v337
    %v342 = vadd.f32 %v251, %v339
    %v343 = vxor.u32 %v341, 2147483648
    %v344 = vxor.u32 %v342, 2147483648
    %v345 = vmul.f32 %v343, 1.442695
    %v346 = vpow.pop %v345
    %v347 = vmul.f32 %v344, 1.442695
    %v348 = vpow.pop %v347
    %v349 = vadd.f32 %v346, 1.0
    %v350 = vadd.f32 %v348, 1.0
    %v351 = vrcp.pop %v349
    %v352 = vmul.f32 1.0, %v351
    %v353 = vrcp.pop %v350
    %v354 = vmul.f32 1.0, %v353
    %v355 = vtanh.pop %v342
    %v356 = vmul.f32 %v352, 0.0
    %358 = vrot.lane.b32.xlu0 %v355, 64
    %v359 = vpop.permute.xlu0 %358
    %v361 = vmul.f32 %v352, %v359
    %363 = vrot.lane.b32.xlu0 %v361, 64
    %v364 = vpop.permute.xlu0 %363
    %v366 = vadd.f32 %v356, %v364
    %v367 = vtanh.pop %v366
    %369 = vrot.lane.b32.xlu0 %v367, 64
    %v370 = vpop.permute.xlu0 %369
    %v372 = vmul.f32 %v354, %v370
    %v374 = vsel %vm266, %v372, 0
    %376 = vmatprep.subr.mxu0 0.0
    %377 = vmatpush1.msra.mxu0 0.0
    %378 = vmatprep.subr.mxu0 0.0
    %379 = vmatpush1.msra.mxu0 0.0
    %380 = vmatprep.subr.mxu0 0.0
    %381 = vmatpush1.msra.mxu0 0.0
    %382 = vmatprep.subr.mxu0 0.0
    %383 = vmatpush1.msra.mxu0 0.0
    %384 = vmatprep.subr.mxu0 0.0
    %385 = vmatpush1.msra.mxu0 0.0
    %386 = vmatprep.subr.mxu0 0.0
    %387 = vmatpush1.msra.mxu0 0.0
    %388 = vmatprep.subr.mxu0 0.0
    %389 = vmatpush1.msra.mxu0 0.0
    %390 = vmatprep.subr.mxu0 0.0
    %391 = vmatpush1.msra.mxu0 0.0
    %392 = vmatprep.subr.mxu0 %v249
    %393 = vmatpush1.msra.mxu0 %v248
    %394 = vmatprep.subr.mxu0 %v247
    %395 = vmatpush1.msra.mxu0 %v246
    %396 = vmatprep.subr.mxu0 %v245
    %397 = vmatpush1.msra.mxu0 %v244
    %398 = vmatprep.subr.mxu0 %v243
    %399 = vmatpush1.msra.mxu0 %v242
    %400 = vmatprep.subr.mxu0 %v241
    %401 = vmatpush1.msra.mxu0 %v240
    %402 = vmatprep.subr.mxu0 %v239
    %403 = vmatpush1.msra.mxu0 %v238
    %404 = vmatprep.subr.mxu0 %v237
    %405 = vmatpush1.msra.mxu0 %v236
    %406 = vmatprep.subr.mxu0 %v235
    %407 = vmatpush1.msra.mxu0 %v234
    %408 = vmatprep.subr.mxu0 0.0
    %409 = vmatpush2.msra.mxu0 0.0
    %410 = vmatprep.subr.mxu0 0.0
    %411 = vmatpush2.msra.mxu0 0.0
    %412 = vmatprep.subr.mxu0 0.0
    %413 = vmatpush2.msra.mxu0 0.0
    %414 = vmatprep.subr.mxu0 0.0
    %415 = vmatpush2.msra.mxu0 0.0
    %416 = vmatprep.subr.mxu0 0.0
    %417 = vmatpush2.msra.mxu0 0.0
    %418 = vmatprep.subr.mxu0 0.0
    %419 = vmatpush2.msra.mxu0 0.0
    %420 = vmatprep.subr.mxu0 0.0
    %421 = vmatpush2.msra.mxu0 0.0
    %422 = vmatprep.subr.mxu0 0.0
    %423 = vmatpush2.msra.mxu0 0.0
    %424 = vmatprep.subr.mxu0 0.0
    %425 = vmatpush2.msra.mxu0 0.0
    %426 = vmatprep.subr.mxu0 0.0
    %427 = vmatpush2.msra.mxu0 0.0
    %428 = vmatprep.subr.mxu0 0.0
    %429 = vmatpush2.msra.mxu0 0.0
    %430 = vmatprep.subr.mxu0 0.0
    %431 = vmatpush2.msra.mxu0 0.0
    %432 = vmatprep.subr.mxu0 0.0
    %433 = vmatpush2.msra.mxu0 0.0
    %434 = vmatprep.subr.mxu0 0.0
    %435 = vmatpush2.msra.mxu0 0.0
    %436 = vmatprep.subr.mxu0 0.0
    %437 = vmatpush2.msra.mxu0 0.0
    %438 = vmatprep.subr.mxu0 0.0
    %439 = vmatpush2.msra.mxu0 0.0
    %440 = vmatprep.mubr.f32.mxu0 0.0
    %441 = vmatmul.mubr.f32.gmra.mxu0 %v374
    %v442 = vpop.f32.mrf.mxu0
    %v443 = vadd.f32 0.0, %v442
    %v444 = vpop.f32.mrf.mxu0
    %v445 = vadd.f32 0.0, %v444
    %446 = vdwg.mxu0
    %v447 = vadd.f32 %v252, %v443
    %v448 = vadd.f32 %v253, %v445
    %v449 = vxor.u32 %v447, 2147483648
    %v450 = vxor.u32 %v448, 2147483648
    %v451 = vmul.f32 %v449, 1.442695
    %v452 = vpow.pop %v451
    %v453 = vmul.f32 %v450, 1.442695
    %v454 = vpow.pop %v453
    %v455 = vadd.f32 %v452, 1.0
    %v456 = vadd.f32 %v454, 1.0
    %v457 = vrcp.pop %v455
    %v458 = vmul.f32 1.0, %v457
    %v459 = vrcp.pop %v456
    %v460 = vmul.f32 1.0, %v459
    %v461 = vtanh.pop %v448
    %v462 = vmul.f32 %v458, %v366
    %464 = vrot.lane.b32.xlu0 %v461, 64
    %v465 = vpop.permute.xlu0 %464
    %v467 = vmul.f32 %v458, %v465
    %469 = vrot.lane.b32.xlu0 %v467, 64
    %v470 = vpop.permute.xlu0 %469
    %v472 = vadd.f32 %v462, %v470
    %v473 = vtanh.pop %v472
    %475 = vrot.lane.b32.xlu0 %v473, 64
    %v476 = vpop.permute.xlu0 %475
    %v478 = vmul.f32 %v460, %v476
    %v480 = vsel %vm266, %v478, 0
    %482 = vmatprep.subr.mxu0 0.0
    %483 = vmatpush1.msra.mxu0 0.0
    %484 = vmatprep.subr.mxu0 0.0
    %485 = vmatpush1.msra.mxu0 0.0
    %486 = vmatprep.subr.mxu0 0.0
    %487 = vmatpush1.msra.mxu0 0.0
    %488 = vmatprep.subr.mxu0 0.0
    %489 = vmatpush1.msra.mxu0 0.0
    %490 = vmatprep.subr.mxu0 0.0
    %491 = vmatpush1.msra.mxu0 0.0
    %492 = vmatprep.subr.mxu0 0.0
    %493 = vmatpush1.msra.mxu0 0.0
    %494 = vmatprep.subr.mxu0 0.0
    %495 = vmatpush1.msra.mxu0 0.0
    %496 = vmatprep.subr.mxu0 0.0
    %497 = vmatpush1.msra.mxu0 0.0
    %498 = vmatprep.subr.mxu0 %v249
    %499 = vmatpush1.msra.mxu0 %v248
    %500 = vmatprep.subr.mxu0 %v247
    %501 = vmatpush1.msra.mxu0 %v246
    %502 = vmatprep.subr.mxu0 %v245
    %503 = vmatpush1.msra.mxu0 %v244
    %504 = vmatprep.subr.mxu0 %v243
    %505 = vmatpush1.msra.mxu0 %v242
    %506 = vmatprep.subr.mxu0 %v241
    %507 = vmatpush1.msra.mxu0 %v240
    %508 = vmatprep.subr.mxu0 %v239
    %509 = vmatpush1.msra.mxu0 %v238
    %510 = vmatprep.subr.mxu0 %v237
    %511 = vmatpush1.msra.mxu0 %v236
    %512 = vmatprep.subr.mxu0 %v235
    %513 = vmatpush1.msra.mxu0 %v234
    %514 = vmatprep.subr.mxu0 0.0
    %515 = vmatpush2.msra.mxu0 0.0
    %516 = vmatprep.subr.mxu0 0.0
    %517 = vmatpush2.msra.mxu0 0.0
    %518 = vmatprep.subr.mxu0 0.0
    %519 = vmatpush2.msra.mxu0 0.0
    %520 = vmatprep.subr.mxu0 0.0
    %521 = vmatpush2.msra.mxu0 0.0
    %522 = vmatprep.subr.mxu0 0.0
    %523 = vmatpush2.msra.mxu0 0.0
    %524 = vmatprep.subr.mxu0 0.0
    %525 = vmatpush2.msra.mxu0 0.0
    %526 = vmatprep.subr.mxu0 0.0
    %527 = vmatpush2.msra.mxu0 0.0
    %528 = vmatprep.subr.mxu0 0.0
    %529 = vmatpush2.msra.mxu0 0.0
    %530 = vmatprep.subr.mxu0 0.0
    %531 = vmatpush2.msra.mxu0 0.0
    %532 = vmatprep.subr.mxu0 0.0
    %533 = vmatpush2.msra.mxu0 0.0
    %534 = vmatprep.subr.mxu0 0.0
    %535 = vmatpush2.msra.mxu0 0.0
    %536 = vmatprep.subr.mxu0 0.0
    %537 = vmatpush2.msra.mxu0 0.0
    %538 = vmatprep.subr.mxu0 0.0
    %539 = vmatpush2.msra.mxu0 0.0
    %540 = vmatprep.subr.mxu0 0.0
    %541 = vmatpush2.msra.mxu0 0.0
    %542 = vmatprep.subr.mxu0 0.0
    %543 = vmatpush2.msra.mxu0 0.0
    %544 = vmatprep.subr.mxu0 0.0
    %545 = vmatpush2.msra.mxu0 0.0
    %546 = vmatprep.mubr.f32.mxu0 0.0
    %547 = vmatmul.mubr.f32.gmra.mxu0 %v480
    %v548 = vpop.f32.mrf.mxu0
    %v549 = vadd.f32 0.0, %v548
    %v550 = vpop.f32.mrf.mxu0
    %v551 = vadd.f32 0.0, %v550
    %552 = vdwg.mxu0
    %v553 = vadd.f32 %v254, %v549
    %v554 = vadd.f32 %v255, %v551
    %v555 = vxor.u32 %v553, 2147483648
    %v556 = vxor.u32 %v554, 2147483648
    %v557 = vmul.f32 %v555, 1.442695
    %v558 = vpow.pop %v557
    %v559 = vmul.f32 %v556, 1.442695
    %v560 = vpow.pop %v559
    %v561 = vadd.f32 %v558, 1.0
    %v562 = vadd.f32 %v560, 1.0
    %v563 = vrcp.pop %v561
    %v564 = vmul.f32 1.0, %v563
    %v565 = vrcp.pop %v562
    %v566 = vmul.f32 1.0, %v565
    %v567 = vtanh.pop %v554
    %v568 = vmul.f32 %v564, %v472
    %570 = vrot.lane.b32.xlu0 %v567, 64
    %v571 = vpop.permute.xlu0 %570
    %v573 = vmul.f32 %v564, %v571
    %575 = vrot.lane.b32.xlu0 %v573, 64
    %v576 = vpop.permute.xlu0 %575
    %v578 = vadd.f32 %v568, %v576
    %v579 = vtanh.pop %v578
    %581 = vrot.lane.b32.xlu0 %v579, 64
    %v582 = vpop.permute.xlu0 %581
    %v584 = vmul.f32 %v566, %v582
    %v586 = vsel %vm266, %v584, 0
    %588 = vmatprep.subr.mxu0 0.0
    %589 = vmatpush1.msra.mxu0 0.0
    %590 = vmatprep.subr.mxu0 0.0
    %591 = vmatpush1.msra.mxu0 0.0
    %592 = vmatprep.subr.mxu0 0.0
    %593 = vmatpush1.msra.mxu0 0.0
    %594 = vmatprep.subr.mxu0 0.0
    %595 = vmatpush1.msra.mxu0 0.0
    %596 = vmatprep.subr.mxu0 0.0
    %597 = vmatpush1.msra.mxu0 0.0
    %598 = vmatprep.subr.mxu0 0.0
    %599 = vmatpush1.msra.mxu0 0.0
    %600 = vmatprep.subr.mxu0 0.0
    %601 = vmatpush1.msra.mxu0 0.0
    %602 = vmatprep.subr.mxu0 0.0
    %603 = vmatpush1.msra.mxu0 0.0
    %604 = vmatprep.subr.mxu0 %v249
    %605 = vmatpush1.msra.mxu0 %v248
    %606 = vmatprep.subr.mxu0 %v247
    %607 = vmatpush1.msra.mxu0 %v246
    %608 = vmatprep.subr.mxu0 %v245
    %609 = vmatpush1.msra.mxu0 %v244
    %610 = vmatprep.subr.mxu0 %v243
    %611 = vmatpush1.msra.mxu0 %v242
    %612 = vmatprep.subr.mxu0 %v241
    %613 = vmatpush1.msra.mxu0 %v240
    %614 = vmatprep.subr.mxu0 %v239
    %615 = vmatpush1.msra.mxu0 %v238
    %616 = vmatprep.subr.mxu0 %v237
    %617 = vmatpush1.msra.mxu0 %v236
    %618 = vmatprep.subr.mxu0 %v235
    %619 = vmatpush1.msra.mxu0 %v234
    %620 = vmatprep.subr.mxu0 0.0
    %621 = vmatpush2.msra.mxu0 0.0
    %622 = vmatprep.subr.mxu0 0.0
    %623 = vmatpush2.msra.mxu0 0.0
    %624 = vmatprep.subr.mxu0 0.0
    %625 = vmatpush2.msra.mxu0 0.0
    %626 = vmatprep.subr.mxu0 0.0
    %627 = vmatpush2.msra.mxu0 0.0
    %628 = vmatprep.subr.mxu0 0.0
    %629 = vmatpush2.msra.mxu0 0.0
    %630 = vmatprep.subr.mxu0 0.0
    %631 = vmatpush2.msra.mxu0 0.0
    %632 = vmatprep.subr.mxu0 0.0
    %633 = vmatpush2.msra.mxu0 0.0
    %634 = vmatprep.subr.mxu0 0.0
    %635 = vmatpush2.msra.mxu0 0.0
    %636 = vmatprep.subr.mxu0 0.0
    %637 = vmatpush2.msra.mxu0 0.0
    %638 = vmatprep.subr.mxu0 0.0
    %639 = vmatpush2.msra.mxu0 0.0
    %640 = vmatprep.subr.mxu0 0.0
    %641 = vmatpush2.msra.mxu0 0.0
    %642 = vmatprep.subr.mxu0 0.0
    %643 = vmatpush2.msra.mxu0 0.0
    %644 = vmatprep.subr.mxu0 0.0
    %645 = vmatpush2.msra.mxu0 0.0
    %646 = vmatprep.subr.mxu0 0.0
    %647 = vmatpush2.msra.mxu0 0.0
    %648 = vmatprep.subr.mxu0 0.0
    %649 = vmatpush2.msra.mxu0 0.0
    %650 = vmatprep.subr.mxu0 0.0
    %651 = vmatpush2.msra.mxu0 0.0
    %652 = vmatprep.mubr.f32.mxu0 0.0
    %653 = vmatmul.mubr.f32.gmra.mxu0 %v586
    %v654 = vpop.f32.mrf.mxu0
    %v655 = vadd.f32 0.0, %v654
    %v656 = vpop.f32.mrf.mxu0
    %v657 = vadd.f32 0.0, %v656
    %658 = vdwg.mxu0
    %v659 = vadd.f32 %v256, %v655
    %v660 = vadd.f32 %v257, %v657
    %v661 = vxor.u32 %v659, 2147483648
    %v662 = vxor.u32 %v660, 2147483648
    %v663 = vmul.f32 %v661, 1.442695
    %v664 = vpow.pop %v663
    %v665 = vmul.f32 %v662, 1.442695
    %v666 = vpow.pop %v665
    %v667 = vadd.f32 %v664, 1.0
    %v668 = vadd.f32 %v666, 1.0
    %v669 = vrcp.pop %v667
    %v670 = vmul.f32 1.0, %v669
    %v671 = vrcp.pop %v668
    %v672 = vmul.f32 1.0, %v671
    %v673 = vtanh.pop %v660
    %v674 = vmul.f32 %v670, %v578
    %676 = vrot.lane.b32.xlu0 %v673, 64
    %v677 = vpop.permute.xlu0 %676
    %v679 = vmul.f32 %v670, %v677
    %681 = vrot.lane.b32.xlu0 %v679, 64
    %v682 = vpop.permute.xlu0 %681
    %v684 = vadd.f32 %v674, %v682
    %v685 = vtanh.pop %v684
    %687 = vrot.lane.b32.xlu0 %v685, 64
    %v688 = vpop.permute.xlu0 %687
    %v690 = vmul.f32 %v672, %v688
    %v692 = vsel %vm266, %v690, 0
    %694 = vmatprep.subr.mxu0 0.0
    %695 = vmatpush1.msra.mxu0 0.0
    %696 = vmatprep.subr.mxu0 0.0
    %697 = vmatpush1.msra.mxu0 0.0
    %698 = vmatprep.subr.mxu0 0.0
    %699 = vmatpush1.msra.mxu0 0.0
    %700 = vmatprep.subr.mxu0 0.0
    %701 = vmatpush1.msra.mxu0 0.0
    %702 = vmatprep.subr.mxu0 0.0
    %703 = vmatpush1.msra.mxu0 0.0
    %704 = vmatprep.subr.mxu0 0.0
    %705 = vmatpush1.msra.mxu0 0.0
    %706 = vmatprep.subr.mxu0 0.0
    %707 = vmatpush1.msra.mxu0 0.0
    %708 = vmatprep.subr.mxu0 0.0
    %709 = vmatpush1.msra.mxu0 0.0
    %710 = vmatprep.subr.mxu0 %v249
    %711 = vmatpush1.msra.mxu0 %v248
    %712 = vmatprep.subr.mxu0 %v247
    %713 = vmatpush1.msra.mxu0 %v246
    %714 = vmatprep.subr.mxu0 %v245
    %715 = vmatpush1.msra.mxu0 %v244
    %716 = vmatprep.subr.mxu0 %v243
    %717 = vmatpush1.msra.mxu0 %v242
    %718 = vmatprep.subr.mxu0 %v241
    %719 = vmatpush1.msra.mxu0 %v240
    %720 = vmatprep.subr.mxu0 %v239
    %721 = vmatpush1.msra.mxu0 %v238
    %722 = vmatprep.subr.mxu0 %v237
    %723 = vmatpush1.msra.mxu0 %v236
    %724 = vmatprep.subr.mxu0 %v235
    %725 = vmatpush1.msra.mxu0 %v234
    %726 = vmatprep.subr.mxu0 0.0
    %727 = vmatpush2.msra.mxu0 0.0
    %728 = vmatprep.subr.mxu0 0.0
    %729 = vmatpush2.msra.mxu0 0.0
    %730 = vmatprep.subr.mxu0 0.0
    %731 = vmatpush2.msra.mxu0 0.0
    %732 = vmatprep.subr.mxu0 0.0
    %733 = vmatpush2.msra.mxu0 0.0
    %734 = vmatprep.subr.mxu0 0.0
    %735 = vmatpush2.msra.mxu0 0.0
    %736 = vmatprep.subr.mxu0 0.0
    %737 = vmatpush2.msra.mxu0 0.0
    %738 = vmatprep.subr.mxu0 0.0
    %739 = vmatpush2.msra.mxu0 0.0
    %740 = vmatprep.subr.mxu0 0.0
    %741 = vmatpush2.msra.mxu0 0.0
    %742 = vmatprep.subr.mxu0 0.0
    %743 = vmatpush2.msra.mxu0 0.0
    %744 = vmatprep.subr.mxu0 0.0
    %745 = vmatpush2.msra.mxu0 0.0
    %746 = vmatprep.subr.mxu0 0.0
    %747 = vmatpush2.msra.mxu0 0.0
    %748 = vmatprep.subr.mxu0 0.0
    %749 = vmatpush2.msra.mxu0 0.0
    %750 = vmatprep.subr.mxu0 0.0
    %751 = vmatpush2.msra.mxu0 0.0
    %752 = vmatprep.subr.mxu0 0.0
    %753 = vmatpush2.msra.mxu0 0.0
    %754 = vmatprep.subr.mxu0 0.0
    %755 = vmatpush2.msra.mxu0 0.0
    %756 = vmatprep.subr.mxu0 0.0
    %757 = vmatpush2.msra.mxu0 0.0
    %758 = vmatprep.mubr.f32.mxu0 0.0
    %759 = vmatmul.mubr.f32.gmra.mxu0 %v692
    %v760 = vpop.f32.mrf.mxu0
    %v761 = vadd.f32 0.0, %v760
    %v762 = vpop.f32.mrf.mxu0
    %v763 = vadd.f32 0.0, %v762
    %764 = vdwg.mxu0
    %v765 = vadd.f32 %v258, %v761
    %v766 = vadd.f32 %v259, %v763
    %v767 = vxor.u32 %v765, 2147483648
    %v768 = vxor.u32 %v766, 2147483648
    %v769 = vmul.f32 %v767, 1.442695
    %v770 = vpow.pop %v769
    %v771 = vmul.f32 %v768, 1.442695
    %v772 = vpow.pop %v771
    %v773 = vadd.f32 %v770, 1.0
    %v774 = vadd.f32 %v772, 1.0
    %v775 = vrcp.pop %v773
    %v776 = vmul.f32 1.0, %v775
    %v777 = vrcp.pop %v774
    %v778 = vmul.f32 1.0, %v777
    %v779 = vtanh.pop %v766
    %v780 = vmul.f32 %v776, %v684
    %782 = vrot.lane.b32.xlu0 %v779, 64
    %v783 = vpop.permute.xlu0 %782
    %v785 = vmul.f32 %v776, %v783
    %787 = vrot.lane.b32.xlu0 %v785, 64
    %v788 = vpop.permute.xlu0 %787
    %v790 = vadd.f32 %v780, %v788
    %v791 = vtanh.pop %v790
    %793 = vrot.lane.b32.xlu0 %v791, 64
    %v794 = vpop.permute.xlu0 %793
    %v796 = vmul.f32 %v778, %v794
    %v798 = vsel %vm266, %v796, 0
    %800 = vmatprep.subr.mxu0 0.0
    %801 = vmatpush1.msra.mxu0 0.0
    %802 = vmatprep.subr.mxu0 0.0
    %803 = vmatpush1.msra.mxu0 0.0
    %804 = vmatprep.subr.mxu0 0.0
    %805 = vmatpush1.msra.mxu0 0.0
    %806 = vmatprep.subr.mxu0 0.0
    %807 = vmatpush1.msra.mxu0 0.0
    %808 = vmatprep.subr.mxu0 0.0
    %809 = vmatpush1.msra.mxu0 0.0
    %810 = vmatprep.subr.mxu0 0.0
    %811 = vmatpush1.msra.mxu0 0.0
    %812 = vmatprep.subr.mxu0 0.0
    %813 = vmatpush1.msra.mxu0 0.0
    %814 = vmatprep.subr.mxu0 0.0
    %815 = vmatpush1.msra.mxu0 0.0
    %816 = vmatprep.subr.mxu0 %v249
    %817 = vmatpush1.msra.mxu0 %v248
    %818 = vmatprep.subr.mxu0 %v247
    %819 = vmatpush1.msra.mxu0 %v246
    %820 = vmatprep.subr.mxu0 %v245
    %821 = vmatpush1.msra.mxu0 %v244
    %822 = vmatprep.subr.mxu0 %v243
    %823 = vmatpush1.msra.mxu0 %v242
    %824 = vmatprep.subr.mxu0 %v241
    %825 = vmatpush1.msra.mxu0 %v240
    %826 = vmatprep.subr.mxu0 %v239
    %827 = vmatpush1.msra.mxu0 %v238
    %828 = vmatprep.subr.mxu0 %v237
    %829 = vmatpush1.msra.mxu0 %v236
    %830 = vmatprep.subr.mxu0 %v235
    %831 = vmatpush1.msra.mxu0 %v234
    %832 = vmatprep.subr.mxu0 0.0
    %833 = vmatpush2.msra.mxu0 0.0
    %834 = vmatprep.subr.mxu0 0.0
    %835 = vmatpush2.msra.mxu0 0.0
    %836 = vmatprep.subr.mxu0 0.0
    %837 = vmatpush2.msra.mxu0 0.0
    %838 = vmatprep.subr.mxu0 0.0
    %839 = vmatpush2.msra.mxu0 0.0
    %840 = vmatprep.subr.mxu0 0.0
    %841 = vmatpush2.msra.mxu0 0.0
    %842 = vmatprep.subr.mxu0 0.0
    %843 = vmatpush2.msra.mxu0 0.0
    %844 = vmatprep.subr.mxu0 0.0
    %845 = vmatpush2.msra.mxu0 0.0
    %846 = vmatprep.subr.mxu0 0.0
    %847 = vmatpush2.msra.mxu0 0.0
    %848 = vmatprep.subr.mxu0 0.0
    %849 = vmatpush2.msra.mxu0 0.0
    %850 = vmatprep.subr.mxu0 0.0
    %851 = vmatpush2.msra.mxu0 0.0
    %852 = vmatprep.subr.mxu0 0.0
    %853 = vmatpush2.msra.mxu0 0.0
    %854 = vmatprep.subr.mxu0 0.0
    %855 = vmatpush2.msra.mxu0 0.0
    %856 = vmatprep.subr.mxu0 0.0
    %857 = vmatpush2.msra.mxu0 0.0
    %858 = vmatprep.subr.mxu0 0.0
    %859 = vmatpush2.msra.mxu0 0.0
    %860 = vmatprep.subr.mxu0 0.0
    %861 = vmatpush2.msra.mxu0 0.0
    %862 = vmatprep.subr.mxu0 0.0
    %863 = vmatpush2.msra.mxu0 0.0
    %864 = vmatprep.mubr.f32.mxu0 0.0
    %865 = vmatmul.mubr.f32.gmra.mxu0 %v798
    %v866 = vpop.f32.mrf.mxu0
    %v867 = vadd.f32 0.0, %v866
    %v868 = vpop.f32.mrf.mxu0
    %v869 = vadd.f32 0.0, %v868
    %870 = vdwg.mxu0
    %v871 = vadd.f32 %v260, %v867
    %v872 = vadd.f32 %v261, %v869
    %v873 = vxor.u32 %v871, 2147483648
    %v874 = vxor.u32 %v872, 2147483648
    %v875 = vmul.f32 %v873, 1.442695
    %v876 = vpow.pop %v875
    %v877 = vmul.f32 %v874, 1.442695
    %v878 = vpow.pop %v877
    %v879 = vadd.f32 %v876, 1.0
    %v880 = vadd.f32 %v878, 1.0
    %v881 = vrcp.pop %v879
    %v882 = vmul.f32 1.0, %v881
    %v883 = vrcp.pop %v880
    %v884 = vmul.f32 1.0, %v883
    %v885 = vtanh.pop %v872
    %v886 = vmul.f32 %v882, %v790
    %888 = vrot.lane.b32.xlu0 %v885, 64
    %v889 = vpop.permute.xlu0 %888
    %v891 = vmul.f32 %v882, %v889
    %893 = vrot.lane.b32.xlu0 %v891, 64
    %v894 = vpop.permute.xlu0 %893
    %v896 = vadd.f32 %v886, %v894
    %v897 = vtanh.pop %v896
    %899 = vrot.lane.b32.xlu0 %v897, 64
    %v900 = vpop.permute.xlu0 %899
    %v902 = vmul.f32 %v884, %v900
    %v904 = vsel %vm266, %v902, 0
    %906 = vmatprep.subr.mxu0 0.0
    %907 = vmatpush1.msra.mxu0 0.0
    %908 = vmatprep.subr.mxu0 0.0
    %909 = vmatpush1.msra.mxu0 0.0
    %910 = vmatprep.subr.mxu0 0.0
    %911 = vmatpush1.msra.mxu0 0.0
    %912 = vmatprep.subr.mxu0 0.0
    %913 = vmatpush1.msra.mxu0 0.0
    %914 = vmatprep.subr.mxu0 0.0
    %915 = vmatpush1.msra.mxu0 0.0
    %916 = vmatprep.subr.mxu0 0.0
    %917 = vmatpush1.msra.mxu0 0.0
    %918 = vmatprep.subr.mxu0 0.0
    %919 = vmatpush1.msra.mxu0 0.0
    %920 = vmatprep.subr.mxu0 0.0
    %921 = vmatpush1.msra.mxu0 0.0
    %922 = vmatprep.subr.mxu0 %v249
    %923 = vmatpush1.msra.mxu0 %v248
    %924 = vmatprep.subr.mxu0 %v247
    %925 = vmatpush1.msra.mxu0 %v246
    %926 = vmatprep.subr.mxu0 %v245
    %927 = vmatpush1.msra.mxu0 %v244
    %928 = vmatprep.subr.mxu0 %v243
    %929 = vmatpush1.msra.mxu0 %v242
    %930 = vmatprep.subr.mxu0 %v241
    %931 = vmatpush1.msra.mxu0 %v240
    %932 = vmatprep.subr.mxu0 %v239
    %933 = vmatpush1.msra.mxu0 %v238
    %934 = vmatprep.subr.mxu0 %v237
    %935 = vmatpush1.msra.mxu0 %v236
    %936 = vmatprep.subr.mxu0 %v235
    %937 = vmatpush1.msra.mxu0 %v234
    %938 = vmatprep.subr.mxu0 0.0
    %939 = vmatpush2.msra.mxu0 0.0
    %940 = vmatprep.subr.mxu0 0.0
    %941 = vmatpush2.msra.mxu0 0.0
    %942 = vmatprep.subr.mxu0 0.0
    %943 = vmatpush2.msra.mxu0 0.0
    %944 = vmatprep.subr.mxu0 0.0
    %945 = vmatpush2.msra.mxu0 0.0
    %946 = vmatprep.subr.mxu0 0.0
    %947 = vmatpush2.msra.mxu0 0.0
    %948 = vmatprep.subr.mxu0 0.0
    %949 = vmatpush2.msra.mxu0 0.0
    %950 = vmatprep.subr.mxu0 0.0
    %951 = vmatpush2.msra.mxu0 0.0
    %952 = vmatprep.subr.mxu0 0.0
    %953 = vmatpush2.msra.mxu0 0.0
    %954 = vmatprep.subr.mxu0 0.0
    %955 = vmatpush2.msra.mxu0 0.0
    %956 = vmatprep.subr.mxu0 0.0
    %957 = vmatpush2.msra.mxu0 0.0
    %958 = vmatprep.subr.mxu0 0.0
    %959 = vmatpush2.msra.mxu0 0.0
    %960 = vmatprep.subr.mxu0 0.0
    %961 = vmatpush2.msra.mxu0 0.0
    %962 = vmatprep.subr.mxu0 0.0
    %963 = vmatpush2.msra.mxu0 0.0
    %964 = vmatprep.subr.mxu0 0.0
    %965 = vmatpush2.msra.mxu0 0.0
    %966 = vmatprep.subr.mxu0 0.0
    %967 = vmatpush2.msra.mxu0 0.0
    %968 = vmatprep.subr.mxu0 0.0
    %969 = vmatpush2.msra.mxu0 0.0
    %970 = vmatprep.mubr.f32.mxu0 0.0
    %971 = vmatmul.mubr.f32.gmra.mxu0 %v904
    %v972 = vpop.f32.mrf.mxu0
    %v973 = vadd.f32 0.0, %v972
    %v974 = vpop.f32.mrf.mxu0
    %v975 = vadd.f32 0.0, %v974
    %976 = vdwg.mxu0
    %v977 = vadd.f32 %v262, %v973
    %v978 = vadd.f32 %v263, %v975
    %v979 = vxor.u32 %v977, 2147483648
    %v980 = vxor.u32 %v978, 2147483648
    %v981 = vmul.f32 %v979, 1.442695
    %v982 = vpow.pop %v981
    %v983 = vmul.f32 %v980, 1.442695
    %v984 = vpow.pop %v983
    %v985 = vadd.f32 %v982, 1.0
    %v986 = vadd.f32 %v984, 1.0
    %v987 = vrcp.pop %v985
    %v988 = vmul.f32 1.0, %v987
    %v989 = vrcp.pop %v986
    %v990 = vmul.f32 1.0, %v989
    %v991 = vtanh.pop %v978
    %v992 = vmul.f32 %v988, %v896
    %994 = vrot.lane.b32.xlu0 %v991, 64
    %v995 = vpop.permute.xlu0 %994
    %v997 = vmul.f32 %v988, %v995
    %999 = vrot.lane.b32.xlu0 %v997, 64
    %v1000 = vpop.permute.xlu0 %999
    %v1002 = vadd.f32 %v992, %v1000
    %v1003 = vtanh.pop %v1002
    %1005 = vrot.lane.b32.xlu0 %v1003, 64
    %v1006 = vpop.permute.xlu0 %1005
    %v1008 = vmul.f32 %v990, %v1006
    %v1010 = vsel %vm266, %v1008, 0
    %1012 = vmatprep.subr.mxu0 0.0
    %1013 = vmatpush1.msra.mxu0 0.0
    %1014 = vmatprep.subr.mxu0 0.0
    %1015 = vmatpush1.msra.mxu0 0.0
    %1016 = vmatprep.subr.mxu0 0.0
    %1017 = vmatpush1.msra.mxu0 0.0
    %1018 = vmatprep.subr.mxu0 0.0
    %1019 = vmatpush1.msra.mxu0 0.0
    %1020 = vmatprep.subr.mxu0 0.0
    %1021 = vmatpush1.msra.mxu0 0.0
    %1022 = vmatprep.subr.mxu0 0.0
    %1023 = vmatpush1.msra.mxu0 0.0
    %1024 = vmatprep.subr.mxu0 0.0
    %1025 = vmatpush1.msra.mxu0 0.0
    %1026 = vmatprep.subr.mxu0 0.0
    %1027 = vmatpush1.msra.mxu0 0.0
    %1028 = vmatprep.subr.mxu0 %v249
    %1029 = vmatpush1.msra.mxu0 %v248
    %1030 = vmatprep.subr.mxu0 %v247
    %1031 = vmatpush1.msra.mxu0 %v246
    %1032 = vmatprep.subr.mxu0 %v245
    %1033 = vmatpush1.msra.mxu0 %v244
    %1034 = vmatprep.subr.mxu0 %v243
    %1035 = vmatpush1.msra.mxu0 %v242
    %1036 = vmatprep.subr.mxu0 %v241
    %1037 = vmatpush1.msra.mxu0 %v240
    %1038 = vmatprep.subr.mxu0 %v239
    %1039 = vmatpush1.msra.mxu0 %v238
    %1040 = vmatprep.subr.mxu0 %v237
    %1041 = vmatpush1.msra.mxu0 %v236
    %1042 = vmatprep.subr.mxu0 %v235
    %1043 = vmatpush1.msra.mxu0 %v234
    %1044 = vmatprep.subr.mxu0 0.0
    %1045 = vmatpush2.msra.mxu0 0.0
    %1046 = vmatprep.subr.mxu0 0.0
    %1047 = vmatpush2.msra.mxu0 0.0
    %1048 = vmatprep.subr.mxu0 0.0
    %1049 = vmatpush2.msra.mxu0 0.0
    %1050 = vmatprep.subr.mxu0 0.0
    %1051 = vmatpush2.msra.mxu0 0.0
    %1052 = vmatprep.subr.mxu0 0.0
    %1053 = vmatpush2.msra.mxu0 0.0
    %1054 = vmatprep.subr.mxu0 0.0
    %1055 = vmatpush2.msra.mxu0 0.0
    %1056 = vmatprep.subr.mxu0 0.0
    %1057 = vmatpush2.msra.mxu0 0.0
    %1058 = vmatprep.subr.mxu0 0.0
    %1059 = vmatpush2.msra.mxu0 0.0
    %1060 = vmatprep.subr.mxu0 0.0
    %1061 = vmatpush2.msra.mxu0 0.0
    %1062 = vmatprep.subr.mxu0 0.0
    %1063 = vmatpush2.msra.mxu0 0.0
    %1064 = vmatprep.subr.mxu0 0.0
    %1065 = vmatpush2.msra.mxu0 0.0
    %1066 = vmatprep.subr.mxu0 0.0
    %1067 = vmatpush2.msra.mxu0 0.0
    %1068 = vmatprep.subr.mxu0 0.0
    %1069 = vmatpush2.msra.mxu0 0.0
    %1070 = vmatprep.subr.mxu0 0.0
    %1071 = vmatpush2.msra.mxu0 0.0
    %1072 = vmatprep.subr.mxu0 0.0
    %1073 = vmatpush2.msra.mxu0 0.0
    %1074 = vmatprep.subr.mxu0 0.0
    %1075 = vmatpush2.msra.mxu0 0.0
    %1076 = vmatprep.mubr.f32.mxu0 0.0
    %1077 = vmatmul.mubr.f32.gmra.mxu0 %v1010
    %v1078 = vpop.f32.mrf.mxu0
    %v1079 = vadd.f32 0.0, %v1078
    %v1080 = vpop.f32.mrf.mxu0
    %v1081 = vadd.f32 0.0, %v1080
    %1082 = vdwg.mxu0
    %v1083 = vadd.f32 %v264, %v1079
    %v1084 = vadd.f32 %v265, %v1081
    %v1085 = vxor.u32 %v1083, 2147483648
    %v1086 = vxor.u32 %v1084, 2147483648
    %v1087 = vmul.f32 %v1085, 1.442695
    %v1088 = vpow.pop %v1087
    %v1089 = vmul.f32 %v1086, 1.442695
    %v1090 = vpow.pop %v1089
    %v1091 = vadd.f32 %v1088, 1.0
    %v1092 = vadd.f32 %v1090, 1.0
    %v1093 = vrcp.pop %v1091
    %v1094 = vmul.f32 1.0, %v1093
    %v1095 = vrcp.pop %v1092
    %v1096 = vmul.f32 1.0, %v1095
    %v1097 = vtanh.pop %v1084
    %v1098 = vmul.f32 %v1094, %v1002
    %1100 = vrot.lane.b32.xlu0 %v1097, 64
    %v1101 = vpop.permute.xlu0 %1100
    %v1103 = vmul.f32 %v1094, %v1101
    %1105 = vrot.lane.b32.xlu0 %v1103, 64
    %v1106 = vpop.permute.xlu0 %1105
    %v1108 = vadd.f32 %v1098, %v1106
    %v1109 = vtanh.pop %v1108
    %1111 = vrot.lane.b32.xlu0 %v1109, 64
    %v1112 = vpop.permute.xlu0 %1111
    %v1114 = vmul.f32 %v1096, %v1112
    %v1115 = vsel %vm67, %v372, %v1114
    %v1116 = vsel %vm67, %v478, %v1008
    %v1117 = vsel %vm67, %v584, %v902
    %v1118 = vsel %vm67, %v690, %v796
    %v1119 = vsel %vm67, %v796, %v690
    %v1120 = vsel %vm67, %v902, %v584
    %v1121 = vsel %vm67, %v1008, %v478
    %v1122 = vsel %vm67, %v1114, %v372
    %v1123 = vld [vmem:[%s4] sm:$0xff]
    %v1124 = vld [vmem:[%s4 + $0x8] sm:$0xff]
    %v1125 = vld [vmem:[%s4 + $0x10] sm:$0xff]
    %v1126 = vld [vmem:[%s4 + $0x18] sm:$0xff]
    %v1127 = vld [vmem:[%s4 + $0x20] sm:$0xff]
    %v1128 = vld [vmem:[%s4 + $0x28] sm:$0xff]
    %v1129 = vld [vmem:[%s4 + $0x30] sm:$0xff]
    %v1130 = vld [vmem:[%s4 + $0x38] sm:$0xff]
    %v1131 = vld [vmem:[%s4 + $0x40] sm:$0xff]
    %v1132 = vld [vmem:[%s4 + $0x48] sm:$0xff]
    %v1133 = vld [vmem:[%s4 + $0x50] sm:$0xff]
    %v1134 = vld [vmem:[%s4 + $0x58] sm:$0xff]
    %v1135 = vld [vmem:[%s4 + $0x60] sm:$0xff]
    %v1136 = vld [vmem:[%s4 + $0x68] sm:$0xff]
    %v1137 = vld [vmem:[%s4 + $0x70] sm:$0xff]
    %v1138 = vld [vmem:[%s4 + $0x78] sm:$0xff]
    %v1139 = vld [vmem:[%s6] sm:$0x3]
    %v1141 = vlaneseq
    %v1142 = vshrl.u32 %v1141, 7
    %v1143 = vsub.s32 0, %v1142
    %v1144 = vrot.slane %v1139, %v1143
    %v1145 = vlaneseq
    %v1146 = vshrl.u32 %v1145, 7
    %v1147 = vsub.s32 1, %v1146
    %v1148 = vrot.slane %v1139, %v1147
    %v1152 = vsel %vm266, %v1115, 0
    %v1155 = vsel %vm266, %v1116, 0
    %v1158 = vsel %vm266, %v1117, 0
    %v1161 = vsel %vm266, %v1118, 0
    %v1164 = vsel %vm266, %v1119, 0
    %v1167 = vsel %vm266, %v1120, 0
    %v1170 = vsel %vm266, %v1121, 0
    %v1173 = vsel %vm266, %v1122, 0
    %1175 = vmatprep.subr.mxu0 0.0
    %1176 = vmatpush1.msra.mxu0 0.0
    %1177 = vmatprep.subr.mxu0 0.0
    %1178 = vmatpush1.msra.mxu0 0.0
    %1179 = vmatprep.subr.mxu0 0.0
    %1180 = vmatpush1.msra.mxu0 0.0
    %1181 = vmatprep.subr.mxu0 0.0
    %1182 = vmatpush1.msra.mxu0 0.0
    %1183 = vmatprep.subr.mxu0 0.0
    %1184 = vmatpush1.msra.mxu0 0.0
    %1185 = vmatprep.subr.mxu0 0.0
    %1186 = vmatpush1.msra.mxu0 0.0
    %1187 = vmatprep.subr.mxu0 0.0
    %1188 = vmatpush1.msra.mxu0 0.0
    %1189 = vmatprep.subr.mxu0 0.0
    %1190 = vmatpush1.msra.mxu0 0.0
    %1191 = vmatprep.subr.mxu0 %v1138
    %1192 = vmatpush1.msra.mxu0 %v1137
    %1193 = vmatprep.subr.mxu0 %v1136
    %1194 = vmatpush1.msra.mxu0 %v1135
    %1195 = vmatprep.subr.mxu0 %v1134
    %1196 = vmatpush1.msra.mxu0 %v1133
    %1197 = vmatprep.subr.mxu0 %v1132
    %1198 = vmatpush1.msra.mxu0 %v1131
    %1199 = vmatprep.subr.mxu0 %v1130
    %1200 = vmatpush1.msra.mxu0 %v1129
    %1201 = vmatprep.subr.mxu0 %v1128
    %1202 = vmatpush1.msra.mxu0 %v1127
    %1203 = vmatprep.subr.mxu0 %v1126
    %1204 = vmatpush1.msra.mxu0 %v1125
    %1205 = vmatprep.subr.mxu0 %v1124
    %1206 = vmatpush1.msra.mxu0 %v1123
    %1207 = vmatprep.subr.mxu0 0.0
    %1208 = vmatpush2.msra.mxu0 0.0
    %1209 = vmatprep.subr.mxu0 0.0
    %1210 = vmatpush2.msra.mxu0 0.0
    %1211 = vmatprep.subr.mxu0 0.0
    %1212 = vmatpush2.msra.mxu0 0.0
    %1213 = vmatprep.subr.mxu0 0.0
    %1214 = vmatpush2.msra.mxu0 0.0
    %1215 = vmatprep.subr.mxu0 0.0
    %1216 = vmatpush2.msra.mxu0 0.0
    %1217 = vmatprep.subr.mxu0 0.0
    %1218 = vmatpush2.msra.mxu0 0.0
    %1219 = vmatprep.subr.mxu0 0.0
    %1220 = vmatpush2.msra.mxu0 0.0
    %1221 = vmatprep.subr.mxu0 0.0
    %1222 = vmatpush2.msra.mxu0 0.0
    %1223 = vmatprep.subr.mxu0 0.0
    %1224 = vmatpush2.msra.mxu0 0.0
    %1225 = vmatprep.subr.mxu0 0.0
    %1226 = vmatpush2.msra.mxu0 0.0
    %1227 = vmatprep.subr.mxu0 0.0
    %1228 = vmatpush2.msra.mxu0 0.0
    %1229 = vmatprep.subr.mxu0 0.0
    %1230 = vmatpush2.msra.mxu0 0.0
    %1231 = vmatprep.subr.mxu0 0.0
    %1232 = vmatpush2.msra.mxu0 0.0
    %1233 = vmatprep.subr.mxu0 0.0
    %1234 = vmatpush2.msra.mxu0 0.0
    %1235 = vmatprep.subr.mxu0 0.0
    %1236 = vmatpush2.msra.mxu0 0.0
    %1237 = vmatprep.subr.mxu0 0.0
    %1238 = vmatpush2.msra.mxu0 0.0
    %1239 = vmatprep.mubr.f32.mxu0 0.0
    %1240 = vmatmul.mubr.f32.gmra.mxu0 %v1152
    %v1241 = vpop.f32.mrf.mxu0
    %v1242 = vadd.f32 %v1144, %v1241
    %v1243 = vpop.f32.mrf.mxu0
    %v1244 = vadd.f32 %v1148, %v1243
    %1245 = vmatprep.mubr.f32.mxu0 0.0
    %1246 = vmatmul.mubr.f32.gmra.mxu0 %v1155
    %v1247 = vpop.f32.mrf.mxu0
    %v1248 = vadd.f32 %v1144, %v1247
    %v1249 = vpop.f32.mrf.mxu0
    %v1250 = vadd.f32 %v1148, %v1249
    %1251 = vmatprep.mubr.f32.mxu0 0.0
    %1252 = vmatmul.mubr.f32.gmra.mxu0 %v1158
    %v1253 = vpop.f32.mrf.mxu0
    %v1254 = vadd.f32 %v1144, %v1253
    %v1255 = vpop.f32.mrf.mxu0
    %v1256 = vadd.f32 %v1148, %v1255
    %1257 = vmatprep.mubr.f32.mxu0 0.0
    %1258 = vmatmul.mubr.f32.gmra.mxu0 %v1161
    %v1259 = vpop.f32.mrf.mxu0
    %v1260 = vadd.f32 %v1144, %v1259
    %v1261 = vpop.f32.mrf.mxu0
    %v1262 = vadd.f32 %v1148, %v1261
    %1263 = vmatprep.mubr.f32.mxu0 0.0
    %1264 = vmatmul.mubr.f32.gmra.mxu0 %v1164
    %v1265 = vpop.f32.mrf.mxu0
    %v1266 = vadd.f32 %v1144, %v1265
    %v1267 = vpop.f32.mrf.mxu0
    %v1268 = vadd.f32 %v1148, %v1267
    %1269 = vmatprep.mubr.f32.mxu0 0.0
    %1270 = vmatmul.mubr.f32.gmra.mxu0 %v1167
    %v1271 = vpop.f32.mrf.mxu0
    %v1272 = vadd.f32 %v1144, %v1271
    %v1273 = vpop.f32.mrf.mxu0
    %v1274 = vadd.f32 %v1148, %v1273
    %1275 = vmatprep.mubr.f32.mxu0 0.0
    %1276 = vmatmul.mubr.f32.gmra.mxu0 %v1170
    %v1277 = vpop.f32.mrf.mxu0
    %v1278 = vadd.f32 %v1144, %v1277
    %v1279 = vpop.f32.mrf.mxu0
    %v1280 = vadd.f32 %v1148, %v1279
    %1281 = vmatprep.mubr.f32.mxu0 0.0
    %1282 = vmatmul.mubr.f32.gmra.mxu0 %v1173
    %v1283 = vpop.f32.mrf.mxu0
    %v1284 = vadd.f32 %v1144, %v1283
    %v1285 = vpop.f32.mrf.mxu0
    %v1286 = vadd.f32 %v1148, %v1285
    %1287 = vdwg.mxu0
    %v1288 = vld [vmem:[#allocation4] sm:$0xff]
    %v1289 = vld [vmem:[#allocation4 + $0x8] sm:$0xff]
    %v1290 = vld [vmem:[#allocation4 + $0x10] sm:$0xff]
    %v1291 = vld [vmem:[#allocation4 + $0x18] sm:$0xff]
    %v1292 = vld [vmem:[#allocation4 + $0x20] sm:$0xff]
    %v1293 = vld [vmem:[#allocation4 + $0x28] sm:$0xff]
    %v1294 = vld [vmem:[#allocation4 + $0x30] sm:$0xff]
    %v1295 = vld [vmem:[#allocation4 + $0x38] sm:$0xff]
    %v1296 = vld [vmem:[#allocation4 + $0x40] sm:$0xff]
    %v1297 = vld [vmem:[#allocation4 + $0x48] sm:$0xff]
    %v1298 = vld [vmem:[#allocation4 + $0x50] sm:$0xff]
    %v1299 = vld [vmem:[#allocation4 + $0x58] sm:$0xff]
    %v1300 = vld [vmem:[#allocation4 + $0x60] sm:$0xff]
    %v1301 = vld [vmem:[#allocation4 + $0x68] sm:$0xff]
    %v1302 = vld [vmem:[#allocation4 + $0x70] sm:$0xff]
    %v1303 = vld [vmem:[#allocation4 + $0x78] sm:$0xff]
    %v1304 = vsel %vm65, %v1284, %v1242
    %v1305 = vsel %vm66, %v1286, %v1244
    %v1306 = vsel %vm65, %v1278, %v1248
    %v1307 = vsel %vm66, %v1280, %v1250
    %v1308 = vsel %vm65, %v1272, %v1254
    %v1309 = vsel %vm66, %v1274, %v1256
    %v1310 = vsel %vm65, %v1266, %v1260
    %v1311 = vsel %vm66, %v1268, %v1262
    %v1312 = vsel %vm65, %v1260, %v1266
    %v1313 = vsel %vm66, %v1262, %v1268
    %v1314 = vsel %vm65, %v1254, %v1272
    %v1315 = vsel %vm66, %v1256, %v1274
    %v1316 = vsel %vm65, %v1248, %v1278
    %v1317 = vsel %vm66, %v1250, %v1280
    %v1318 = vsel %vm65, %v1242, %v1284
    %v1319 = vsel %vm66, %v1244, %v1286
    %1320 = vmatprep.subr.mxu0 0.0
    %1321 = vmatpush1.msra.mxu0 0.0
    %1322 = vmatprep.subr.mxu0 0.0
    %1323 = vmatpush1.msra.mxu0 0.0
    %1324 = vmatprep.subr.mxu0 0.0
    %1325 = vmatpush1.msra.mxu0 0.0
    %1326 = vmatprep.subr.mxu0 0.0
    %1327 = vmatpush1.msra.mxu0 0.0
    %1328 = vmatprep.subr.mxu0 0.0
    %1329 = vmatpush1.msra.mxu0 0.0
    %1330 = vmatprep.subr.mxu0 0.0
    %1331 = vmatpush1.msra.mxu0 0.0
    %1332 = vmatprep.subr.mxu0 0.0
    %1333 = vmatpush1.msra.mxu0 0.0
    %1334 = vmatprep.subr.mxu0 0.0
    %1335 = vmatpush1.msra.mxu0 0.0
    %1336 = vmatprep.subr.mxu0 %v1303
    %1337 = vmatpush1.msra.mxu0 %v1302
    %1338 = vmatprep.subr.mxu0 %v1301
    %1339 = vmatpush1.msra.mxu0 %v1300
    %1340 = vmatprep.subr.mxu0 %v1299
    %1341 = vmatpush1.msra.mxu0 %v1298
    %1342 = vmatprep.subr.mxu0 %v1297
    %1343 = vmatpush1.msra.mxu0 %v1296
    %1344 = vmatprep.subr.mxu0 %v1295
    %1345 = vmatpush1.msra.mxu0 %v1294
    %1346 = vmatprep.subr.mxu0 %v1293
    %1347 = vmatpush1.msra.mxu0 %v1292
    %1348 = vmatprep.subr.mxu0 %v1291
    %1349 = vmatpush1.msra.mxu0 %v1290
    %1350 = vmatprep.subr.mxu0 %v1289
    %1351 = vmatpush1.msra.mxu0 %v1288
    %1352 = vmatprep.subr.mxu0 0.0
    %1353 = vmatpush2.msra.mxu0 0.0
    %1354 = vmatprep.subr.mxu0 0.0
    %1355 = vmatpush2.msra.mxu0 0.0
    %1356 = vmatprep.subr.mxu0 0.0
    %1357 = vmatpush2.msra.mxu0 0.0
    %1358 = vmatprep.subr.mxu0 0.0
    %1359 = vmatpush2.msra.mxu0 0.0
    %1360 = vmatprep.subr.mxu0 0.0
    %1361 = vmatpush2.msra.mxu0 0.0
    %1362 = vmatprep.subr.mxu0 0.0
    %1363 = vmatpush2.msra.mxu0 0.0
    %1364 = vmatprep.subr.mxu0 0.0
    %1365 = vmatpush2.msra.mxu0 0.0
    %1366 = vmatprep.subr.mxu0 0.0
    %1367 = vmatpush2.msra.mxu0 0.0
    %1368 = vmatprep.subr.mxu0 0.0
    %1369 = vmatpush2.msra.mxu0 0.0
    %1370 = vmatprep.subr.mxu0 0.0
    %1371 = vmatpush2.msra.mxu0 0.0
    %1372 = vmatprep.subr.mxu0 0.0
    %1373 = vmatpush2.msra.mxu0 0.0
    %1374 = vmatprep.subr.mxu0 0.0
    %1375 = vmatpush2.msra.mxu0 0.0
    %1376 = vmatprep.subr.mxu0 0.0
    %1377 = vmatpush2.msra.mxu0 0.0
    %1378 = vmatprep.subr.mxu0 0.0
    %1379 = vmatpush2.msra.mxu0 0.0
    %1380 = vmatprep.subr.mxu0 0.0
    %1381 = vmatpush2.msra.mxu0 0.0
    %1382 = vmatprep.subr.mxu0 0.0
    %1383 = vmatpush2.msra.mxu0 0.0
    %1384 = vmatprep.mubr.f32.mxu0 0.0
    %1385 = vmatmul.mubr.f32.gmra.mxu0 %v268
    %v1386 = vpop.f32.mrf.mxu0
    %v1387 = vadd.f32 0.0, %v1386
    %v1388 = vpop.f32.mrf.mxu0
    %v1389 = vadd.f32 0.0, %v1388
    %1390 = vdwg.mxu0
    %v1391 = vadd.f32 %v1304, %v1387
    %v1392 = vadd.f32 %v1305, %v1389
    %v1393 = vxor.u32 %v1391, 2147483648
    %v1394 = vxor.u32 %v1392, 2147483648
    %v1395 = vmul.f32 %v1393, 1.442695
    %v1396 = vpow.pop %v1395
    %v1397 = vmul.f32 %v1394, 1.442695
    %v1398 = vpow.pop %v1397
    %v1399 = vadd.f32 %v1396, 1.0
    %v1400 = vadd.f32 %v1398, 1.0
    %v1401 = vrcp.pop %v1399
    %v1402 = vmul.f32 1.0, %v1401
    %v1403 = vrcp.pop %v1400
    %v1404 = vmul.f32 1.0, %v1403
    %v1405 = vtanh.pop %v1392
    %v1406 = vmul.f32 %v1402, 0.0
    %1408 = vrot.lane.b32.xlu0 %v1405, 64
    %v1409 = vpop.permute.xlu0 %1408
    %v1411 = vmul.f32 %v1402, %v1409
    %1413 = vrot.lane.b32.xlu0 %v1411, 64
    %v1414 = vpop.permute.xlu0 %1413
    %v1416 = vadd.f32 %v1406, %v1414
    %v1417 = vtanh.pop %v1416
    %1419 = vrot.lane.b32.xlu0 %v1417, 64
    %v1420 = vpop.permute.xlu0 %1419
    %v1422 = vmul.f32 %v1404, %v1420
    %v1424 = vsel %vm266, %v1422, 0
    %1426 = vmatprep.subr.mxu0 0.0
    %1427 = vmatpush1.msra.mxu0 0.0
    %1428 = vmatprep.subr.mxu0 0.0
    %1429 = vmatpush1.msra.mxu0 0.0
    %1430 = vmatprep.subr.mxu0 0.0
    %1431 = vmatpush1.msra.mxu0 0.0
    %1432 = vmatprep.subr.mxu0 0.0
    %1433 = vmatpush1.msra.mxu0 0.0
    %1434 = vmatprep.subr.mxu0 0.0
    %1435 = vmatpush1.msra.mxu0 0.0
    %1436 = vmatprep.subr.mxu0 0.0
    %1437 = vmatpush1.msra.mxu0 0.0
    %1438 = vmatprep.subr.mxu0 0.0
    %1439 = vmatpush1.msra.mxu0 0.0
    %1440 = vmatprep.subr.mxu0 0.0
    %1441 = vmatpush1.msra.mxu0 0.0
    %1442 = vmatprep.subr.mxu0 %v1303
    %1443 = vmatpush1.msra.mxu0 %v1302
    %1444 = vmatprep.subr.mxu0 %v1301
    %1445 = vmatpush1.msra.mxu0 %v1300
    %1446 = vmatprep.subr.mxu0 %v1299
    %1447 = vmatpush1.msra.mxu0 %v1298
    %1448 = vmatprep.subr.mxu0 %v1297
    %1449 = vmatpush1.msra.mxu0 %v1296
    %1450 = vmatprep.subr.mxu0 %v1295
    %1451 = vmatpush1.msra.mxu0 %v1294
    %1452 = vmatprep.subr.mxu0 %v1293
    %1453 = vmatpush1.msra.mxu0 %v1292
    %1454 = vmatprep.subr.mxu0 %v1291
    %1455 = vmatpush1.msra.mxu0 %v1290
    %1456 = vmatprep.subr.mxu0 %v1289
    %1457 = vmatpush1.msra.mxu0 %v1288
    %1458 = vmatprep.subr.mxu0 0.0
    %1459 = vmatpush2.msra.mxu0 0.0
    %1460 = vmatprep.subr.mxu0 0.0
    %1461 = vmatpush2.msra.mxu0 0.0
    %1462 = vmatprep.subr.mxu0 0.0
    %1463 = vmatpush2.msra.mxu0 0.0
    %1464 = vmatprep.subr.mxu0 0.0
    %1465 = vmatpush2.msra.mxu0 0.0
    %1466 = vmatprep.subr.mxu0 0.0
    %1467 = vmatpush2.msra.mxu0 0.0
    %1468 = vmatprep.subr.mxu0 0.0
    %1469 = vmatpush2.msra.mxu0 0.0
    %1470 = vmatprep.subr.mxu0 0.0
    %1471 = vmatpush2.msra.mxu0 0.0
    %1472 = vmatprep.subr.mxu0 0.0
    %1473 = vmatpush2.msra.mxu0 0.0
    %1474 = vmatprep.subr.mxu0 0.0
    %1475 = vmatpush2.msra.mxu0 0.0
    %1476 = vmatprep.subr.mxu0 0.0
    %1477 = vmatpush2.msra.mxu0 0.0
    %1478 = vmatprep.subr.mxu0 0.0
    %1479 = vmatpush2.msra.mxu0 0.0
    %1480 = vmatprep.subr.mxu0 0.0
    %1481 = vmatpush2.msra.mxu0 0.0
    %1482 = vmatprep.subr.mxu0 0.0
    %1483 = vmatpush2.msra.mxu0 0.0
    %1484 = vmatprep.subr.mxu0 0.0
    %1485 = vmatpush2.msra.mxu0 0.0
    %1486 = vmatprep.subr.mxu0 0.0
    %1487 = vmatpush2.msra.mxu0 0.0
    %1488 = vmatprep.subr.mxu0 0.0
    %1489 = vmatpush2.msra.mxu0 0.0
    %1490 = vmatprep.mubr.f32.mxu0 0.0
    %1491 = vmatmul.mubr.f32.gmra.mxu0 %v1424
    %v1492 = vpop.f32.mrf.mxu0
    %v1493 = vadd.f32 0.0, %v1492
    %v1494 = vpop.f32.mrf.mxu0
    %v1495 = vadd.f32 0.0, %v1494
    %1496 = vdwg.mxu0
    %v1497 = vadd.f32 %v1306, %v1493
    %v1498 = vadd.f32 %v1307, %v1495
    %v1499 = vxor.u32 %v1497, 2147483648
    %v1500 = vxor.u32 %v1498, 2147483648
    %v1501 = vmul.f32 %v1499, 1.442695
    %v1502 = vpow.pop %v1501
    %v1503 = vmul.f32 %v1500, 1.442695
    %v1504 = vpow.pop %v1503
    %v1505 = vadd.f32 %v1502, 1.0
    %v1506 = vadd.f32 %v1504, 1.0
    %v1507 = vrcp.pop %v1505
    %v1508 = vmul.f32 1.0, %v1507
    %v1509 = vrcp.pop %v1506
    %v1510 = vmul.f32 1.0, %v1509
    %v1511 = vtanh.pop %v1498
    %v1512 = vmul.f32 %v1508, %v1416
    %1514 = vrot.lane.b32.xlu0 %v1511, 64
    %v1515 = vpop.permute.xlu0 %1514
    %v1517 = vmul.f32 %v1508, %v1515
    %1519 = vrot.lane.b32.xlu0 %v1517, 64
    %v1520 = vpop.permute.xlu0 %1519
    %v1522 = vadd.f32 %v1512, %v1520
    %v1523 = vtanh.pop %v1522
    %1525 = vrot.lane.b32.xlu0 %v1523, 64
    %v1526 = vpop.permute.xlu0 %1525
    %v1528 = vmul.f32 %v1510, %v1526
    %v1530 = vsel %vm266, %v1528, 0
    %1532 = vmatprep.subr.mxu0 0.0
    %1533 = vmatpush1.msra.mxu0 0.0
    %1534 = vmatprep.subr.mxu0 0.0
    %1535 = vmatpush1.msra.mxu0 0.0
    %1536 = vmatprep.subr.mxu0 0.0
    %1537 = vmatpush1.msra.mxu0 0.0
    %1538 = vmatprep.subr.mxu0 0.0
    %1539 = vmatpush1.msra.mxu0 0.0
    %1540 = vmatprep.subr.mxu0 0.0
    %1541 = vmatpush1.msra.mxu0 0.0
    %1542 = vmatprep.subr.mxu0 0.0
    %1543 = vmatpush1.msra.mxu0 0.0
    %1544 = vmatprep.subr.mxu0 0.0
    %1545 = vmatpush1.msra.mxu0 0.0
    %1546 = vmatprep.subr.mxu0 0.0
    %1547 = vmatpush1.msra.mxu0 0.0
    %1548 = vmatprep.subr.mxu0 %v1303
    %1549 = vmatpush1.msra.mxu0 %v1302
    %1550 = vmatprep.subr.mxu0 %v1301
    %1551 = vmatpush1.msra.mxu0 %v1300
    %1552 = vmatprep.subr.mxu0 %v1299
    %1553 = vmatpush1.msra.mxu0 %v1298
    %1554 = vmatprep.subr.mxu0 %v1297
    %1555 = vmatpush1.msra.mxu0 %v1296
    %1556 = vmatprep.subr.mxu0 %v1295
    %1557 = vmatpush1.msra.mxu0 %v1294
    %1558 = vmatprep.subr.mxu0 %v1293
    %1559 = vmatpush1.msra.mxu0 %v1292
    %1560 = vmatprep.subr.mxu0 %v1291
    %1561 = vmatpush1.msra.mxu0 %v1290
    %1562 = vmatprep.subr.mxu0 %v1289
    %1563 = vmatpush1.msra.mxu0 %v1288
    %1564 = vmatprep.subr.mxu0 0.0
    %1565 = vmatpush2.msra.mxu0 0.0
    %1566 = vmatprep.subr.mxu0 0.0
    %1567 = vmatpush2.msra.mxu0 0.0
    %1568 = vmatprep.subr.mxu0 0.0
    %1569 = vmatpush2.msra.mxu0 0.0
    %1570 = vmatprep.subr.mxu0 0.0
    %1571 = vmatpush2.msra.mxu0 0.0
    %1572 = vmatprep.subr.mxu0 0.0
    %1573 = vmatpush2.msra.mxu0 0.0
    %1574 = vmatprep.subr.mxu0 0.0
    %1575 = vmatpush2.msra.mxu0 0.0
    %1576 = vmatprep.subr.mxu0 0.0
    %1577 = vmatpush2.msra.mxu0 0.0
    %1578 = vmatprep.subr.mxu0 0.0
    %1579 = vmatpush2.msra.mxu0 0.0
    %1580 = vmatprep.subr.mxu0 0.0
    %1581 = vmatpush2.msra.mxu0 0.0
    %1582 = vmatprep.subr.mxu0 0.0
    %1583 = vmatpush2.msra.mxu0 0.0
    %1584 = vmatprep.subr.mxu0 0.0
    %1585 = vmatpush2.msra.mxu0 0.0
    %1586 = vmatprep.subr.mxu0 0.0
    %1587 = vmatpush2.msra.mxu0 0.0
    %1588 = vmatprep.subr.mxu0 0.0
    %1589 = vmatpush2.msra.mxu0 0.0
    %1590 = vmatprep.subr.mxu0 0.0
    %1591 = vmatpush2.msra.mxu0 0.0
    %1592 = vmatprep.subr.mxu0 0.0
    %1593 = vmatpush2.msra.mxu0 0.0
    %1594 = vmatprep.subr.mxu0 0.0
    %1595 = vmatpush2.msra.mxu0 0.0
    %1596 = vmatprep.mubr.f32.mxu0 0.0
    %1597 = vmatmul.mubr.f32.gmra.mxu0 %v1530
    %v1598 = vpop.f32.mrf.mxu0
    %v1599 = vadd.f32 0.0, %v1598
    %v1600 = vpop.f32.mrf.mxu0
    %v1601 = vadd.f32 0.0, %v1600
    %1602 = vdwg.mxu0
    %v1603 = vadd.f32 %v1308, %v1599
    %v1604 = vadd.f32 %v1309, %v1601
    %v1605 = vxor.u32 %v1603, 2147483648
    %v1606 = vxor.u32 %v1604, 2147483648
    %v1607 = vmul.f32 %v1605, 1.442695
    %v1608 = vpow.pop %v1607
    %v1609 = vmul.f32 %v1606, 1.442695
    %v1610 = vpow.pop %v1609
    %v1611 = vadd.f32 %v1608, 1.0
    %v1612 = vadd.f32 %v1610, 1.0
    %v1613 = vrcp.pop %v1611
    %v1614 = vmul.f32 1.0, %v1613
    %v1615 = vrcp.pop %v1612
    %v1616 = vmul.f32 1.0, %v1615
    %v1617 = vtanh.pop %v1604
    %v1618 = vmul.f32 %v1614, %v1522
    %1620 = vrot.lane.b32.xlu0 %v1617, 64
    %v1621 = vpop.permute.xlu0 %1620
    %v1623 = vmul.f32 %v1614, %v1621
    %1625 = vrot.lane.b32.xlu0 %v1623, 64
    %v1626 = vpop.permute.xlu0 %1625
    %v1628 = vadd.f32 %v1618, %v1626
    %v1629 = vtanh.pop %v1628
    %1631 = vrot.lane.b32.xlu0 %v1629, 64
    %v1632 = vpop.permute.xlu0 %1631
    %v1634 = vmul.f32 %v1616, %v1632
    %v1636 = vsel %vm266, %v1634, 0
    %1638 = vmatprep.subr.mxu0 0.0
    %1639 = vmatpush1.msra.mxu0 0.0
    %1640 = vmatprep.subr.mxu0 0.0
    %1641 = vmatpush1.msra.mxu0 0.0
    %1642 = vmatprep.subr.mxu0 0.0
    %1643 = vmatpush1.msra.mxu0 0.0
    %1644 = vmatprep.subr.mxu0 0.0
    %1645 = vmatpush1.msra.mxu0 0.0
    %1646 = vmatprep.subr.mxu0 0.0
    %1647 = vmatpush1.msra.mxu0 0.0
    %1648 = vmatprep.subr.mxu0 0.0
    %1649 = vmatpush1.msra.mxu0 0.0
    %1650 = vmatprep.subr.mxu0 0.0
    %1651 = vmatpush1.msra.mxu0 0.0
    %1652 = vmatprep.subr.mxu0 0.0
    %1653 = vmatpush1.msra.mxu0 0.0
    %1654 = vmatprep.subr.mxu0 %v1303
    %1655 = vmatpush1.msra.mxu0 %v1302
    %1656 = vmatprep.subr.mxu0 %v1301
    %1657 = vmatpush1.msra.mxu0 %v1300
    %1658 = vmatprep.subr.mxu0 %v1299
    %1659 = vmatpush1.msra.mxu0 %v1298
    %1660 = vmatprep.subr.mxu0 %v1297
    %1661 = vmatpush1.msra.mxu0 %v1296
    %1662 = vmatprep.subr.mxu0 %v1295
    %1663 = vmatpush1.msra.mxu0 %v1294
    %1664 = vmatprep.subr.mxu0 %v1293
    %1665 = vmatpush1.msra.mxu0 %v1292
    %1666 = vmatprep.subr.mxu0 %v1291
    %1667 = vmatpush1.msra.mxu0 %v1290
    %1668 = vmatprep.subr.mxu0 %v1289
    %1669 = vmatpush1.msra.mxu0 %v1288
    %1670 = vmatprep.subr.mxu0 0.0
    %1671 = vmatpush2.msra.mxu0 0.0
    %1672 = vmatprep.subr.mxu0 0.0
    %1673 = vmatpush2.msra.mxu0 0.0
    %1674 = vmatprep.subr.mxu0 0.0
    %1675 = vmatpush2.msra.mxu0 0.0
    %1676 = vmatprep.subr.mxu0 0.0
    %1677 = vmatpush2.msra.mxu0 0.0
    %1678 = vmatprep.subr.mxu0 0.0
    %1679 = vmatpush2.msra.mxu0 0.0
    %1680 = vmatprep.subr.mxu0 0.0
    %1681 = vmatpush2.msra.mxu0 0.0
    %1682 = vmatprep.subr.mxu0 0.0
    %1683 = vmatpush2.msra.mxu0 0.0
    %1684 = vmatprep.subr.mxu0 0.0
    %1685 = vmatpush2.msra.mxu0 0.0
    %1686 = vmatprep.subr.mxu0 0.0
    %1687 = vmatpush2.msra.mxu0 0.0
    %1688 = vmatprep.subr.mxu0 0.0
    %1689 = vmatpush2.msra.mxu0 0.0
    %1690 = vmatprep.subr.mxu0 0.0
    %1691 = vmatpush2.msra.mxu0 0.0
    %1692 = vmatprep.subr.mxu0 0.0
    %1693 = vmatpush2.msra.mxu0 0.0
    %1694 = vmatprep.subr.mxu0 0.0
    %1695 = vmatpush2.msra.mxu0 0.0
    %1696 = vmatprep.subr.mxu0 0.0
    %1697 = vmatpush2.msra.mxu0 0.0
    %1698 = vmatprep.subr.mxu0 0.0
    %1699 = vmatpush2.msra.mxu0 0.0
    %1700 = vmatprep.subr.mxu0 0.0
    %1701 = vmatpush2.msra.mxu0 0.0
    %1702 = vmatprep.mubr.f32.mxu0 0.0
    %1703 = vmatmul.mubr.f32.gmra.mxu0 %v1636
    %v1704 = vpop.f32.mrf.mxu0
    %v1705 = vadd.f32 0.0, %v1704
    %v1706 = vpop.f32.mrf.mxu0
    %v1707 = vadd.f32 0.0, %v1706
    %1708 = vdwg.mxu0
    %v1709 = vadd.f32 %v1310, %v1705
    %v1710 = vadd.f32 %v1311, %v1707
    %v1711 = vxor.u32 %v1709, 2147483648
    %v1712 = vxor.u32 %v1710, 2147483648
    %v1713 = vmul.f32 %v1711, 1.442695
    %v1714 = vpow.pop %v1713
    %v1715 = vmul.f32 %v1712, 1.442695
    %v1716 = vpow.pop %v1715
    %v1717 = vadd.f32 %v1714, 1.0
    %v1718 = vadd.f32 %v1716, 1.0
    %v1719 = vrcp.pop %v1717
    %v1720 = vmul.f32 1.0, %v1719
    %v1721 = vrcp.pop %v1718
    %v1722 = vmul.f32 1.0, %v1721
    %v1723 = vtanh.pop %v1710
    %v1724 = vmul.f32 %v1720, %v1628
    %1726 = vrot.lane.b32.xlu0 %v1723, 64
    %v1727 = vpop.permute.xlu0 %1726
    %v1729 = vmul.f32 %v1720, %v1727
    %1731 = vrot.lane.b32.xlu0 %v1729, 64
    %v1732 = vpop.permute.xlu0 %1731
    %v1734 = vadd.f32 %v1724, %v1732
    %v1735 = vtanh.pop %v1734
    %1737 = vrot.lane.b32.xlu0 %v1735, 64
    %v1738 = vpop.permute.xlu0 %1737
    %v1740 = vmul.f32 %v1722, %v1738
    %v1742 = vsel %vm266, %v1740, 0
    %1744 = vmatprep.subr.mxu0 0.0
    %1745 = vmatpush1.msra.mxu0 0.0
    %1746 = vmatprep.subr.mxu0 0.0
    %1747 = vmatpush1.msra.mxu0 0.0
    %1748 = vmatprep.subr.mxu0 0.0
    %1749 = vmatpush1.msra.mxu0 0.0
    %1750 = vmatprep.subr.mxu0 0.0
    %1751 = vmatpush1.msra.mxu0 0.0
    %1752 = vmatprep.subr.mxu0 0.0
    %1753 = vmatpush1.msra.mxu0 0.0
    %1754 = vmatprep.subr.mxu0 0.0
    %1755 = vmatpush1.msra.mxu0 0.0
    %1756 = vmatprep.subr.mxu0 0.0
    %1757 = vmatpush1.msra.mxu0 0.0
    %1758 = vmatprep.subr.mxu0 0.0
    %1759 = vmatpush1.msra.mxu0 0.0
    %1760 = vmatprep.subr.mxu0 %v1303
    %1761 = vmatpush1.msra.mxu0 %v1302
    %1762 = vmatprep.subr.mxu0 %v1301
    %1763 = vmatpush1.msra.mxu0 %v1300
    %1764 = vmatprep.subr.mxu0 %v1299
    %1765 = vmatpush1.msra.mxu0 %v1298
    %1766 = vmatprep.subr.mxu0 %v1297
    %1767 = vmatpush1.msra.mxu0 %v1296
    %1768 = vmatprep.subr.mxu0 %v1295
    %1769 = vmatpush1.msra.mxu0 %v1294
    %1770 = vmatprep.subr.mxu0 %v1293
    %1771 = vmatpush1.msra.mxu0 %v1292
    %1772 = vmatprep.subr.mxu0 %v1291
    %1773 = vmatpush1.msra.mxu0 %v1290
    %1774 = vmatprep.subr.mxu0 %v1289
    %1775 = vmatpush1.msra.mxu0 %v1288
    %1776 = vmatprep.subr.mxu0 0.0
    %1777 = vmatpush2.msra.mxu0 0.0
    %1778 = vmatprep.subr.mxu0 0.0
    %1779 = vmatpush2.msra.mxu0 0.0
    %1780 = vmatprep.subr.mxu0 0.0
    %1781 = vmatpush2.msra.mxu0 0.0
    %1782 = vmatprep.subr.mxu0 0.0
    %1783 = vmatpush2.msra.mxu0 0.0
    %1784 = vmatprep.subr.mxu0 0.0
    %1785 = vmatpush2.msra.mxu0 0.0
    %1786 = vmatprep.subr.mxu0 0.0
    %1787 = vmatpush2.msra.mxu0 0.0
    %1788 = vmatprep.subr.mxu0 0.0
    %1789 = vmatpush2.msra.mxu0 0.0
    %1790 = vmatprep.subr.mxu0 0.0
    %1791 = vmatpush2.msra.mxu0 0.0
    %1792 = vmatprep.subr.mxu0 0.0
    %1793 = vmatpush2.msra.mxu0 0.0
    %1794 = vmatprep.subr.mxu0 0.0
    %1795 = vmatpush2.msra.mxu0 0.0
    %1796 = vmatprep.subr.mxu0 0.0
    %1797 = vmatpush2.msra.mxu0 0.0
    %1798 = vmatprep.subr.mxu0 0.0
    %1799 = vmatpush2.msra.mxu0 0.0
    %1800 = vmatprep.subr.mxu0 0.0
    %1801 = vmatpush2.msra.mxu0 0.0
    %1802 = vmatprep.subr.mxu0 0.0
    %1803 = vmatpush2.msra.mxu0 0.0
    %1804 = vmatprep.subr.mxu0 0.0
    %1805 = vmatpush2.msra.mxu0 0.0
    %1806 = vmatprep.subr.mxu0 0.0
    %1807 = vmatpush2.msra.mxu0 0.0
    %1808 = vmatprep.mubr.f32.mxu0 0.0
    %1809 = vmatmul.mubr.f32.gmra.mxu0 %v1742
    %v1810 = vpop.f32.mrf.mxu0
    %v1811 = vadd.f32 0.0, %v1810
    %v1812 = vpop.f32.mrf.mxu0
    %v1813 = vadd.f32 0.0, %v1812
    %1814 = vdwg.mxu0
    %v1815 = vadd.f32 %v1312, %v1811
    %v1816 = vadd.f32 %v1313, %v1813
    %v1817 = vxor.u32 %v1815, 2147483648
    %v1818 = vxor.u32 %v1816, 2147483648
    %v1819 = vmul.f32 %v1817, 1.442695
    %v1820 = vpow.pop %v1819
    %v1821 = vmul.f32 %v1818, 1.442695
    %v1822 = vpow.pop %v1821
    %v1823 = vadd.f32 %v1820, 1.0
    %v1824 = vadd.f32 %v1822, 1.0
    %v1825 = vrcp.pop %v1823
    %v1826 = vmul.f32 1.0, %v1825
    %v1827 = vrcp.pop %v1824
    %v1828 = vmul.f32 1.0, %v1827
    %v1829 = vtanh.pop %v1816
    %v1830 = vmul.f32 %v1826, %v1734
    %1832 = vrot.lane.b32.xlu0 %v1829, 64
    %v1833 = vpop.permute.xlu0 %1832
    %v1835 = vmul.f32 %v1826, %v1833
    %1837 = vrot.lane.b32.xlu0 %v1835, 64
    %v1838 = vpop.permute.xlu0 %1837
    %v1840 = vadd.f32 %v1830, %v1838
    %v1841 = vtanh.pop %v1840
    %1843 = vrot.lane.b32.xlu0 %v1841, 64
    %v1844 = vpop.permute.xlu0 %1843
    %v1846 = vmul.f32 %v1828, %v1844
    %v1848 = vsel %vm266, %v1846, 0
    %1850 = vmatprep.subr.mxu0 0.0
    %1851 = vmatpush1.msra.mxu0 0.0
    %1852 = vmatprep.subr.mxu0 0.0
    %1853 = vmatpush1.msra.mxu0 0.0
    %1854 = vmatprep.subr.mxu0 0.0
    %1855 = vmatpush1.msra.mxu0 0.0
    %1856 = vmatprep.subr.mxu0 0.0
    %1857 = vmatpush1.msra.mxu0 0.0
    %1858 = vmatprep.subr.mxu0 0.0
    %1859 = vmatpush1.msra.mxu0 0.0
    %1860 = vmatprep.subr.mxu0 0.0
    %1861 = vmatpush1.msra.mxu0 0.0
    %1862 = vmatprep.subr.mxu0 0.0
    %1863 = vmatpush1.msra.mxu0 0.0
    %1864 = vmatprep.subr.mxu0 0.0
    %1865 = vmatpush1.msra.mxu0 0.0
    %1866 = vmatprep.subr.mxu0 %v1303
    %1867 = vmatpush1.msra.mxu0 %v1302
    %1868 = vmatprep.subr.mxu0 %v1301
    %1869 = vmatpush1.msra.mxu0 %v1300
    %1870 = vmatprep.subr.mxu0 %v1299
    %1871 = vmatpush1.msra.mxu0 %v1298
    %1872 = vmatprep.subr.mxu0 %v1297
    %1873 = vmatpush1.msra.mxu0 %v1296
    %1874 = vmatprep.subr.mxu0 %v1295
    %1875 = vmatpush1.msra.mxu0 %v1294
    %1876 = vmatprep.subr.mxu0 %v1293
    %1877 = vmatpush1.msra.mxu0 %v1292
    %1878 = vmatprep.subr.mxu0 %v1291
    %1879 = vmatpush1.msra.mxu0 %v1290
    %1880 = vmatprep.subr.mxu0 %v1289
    %1881 = vmatpush1.msra.mxu0 %v1288
    %1882 = vmatprep.subr.mxu0 0.0
    %1883 = vmatpush2.msra.mxu0 0.0
    %1884 = vmatprep.subr.mxu0 0.0
    %1885 = vmatpush2.msra.mxu0 0.0
    %1886 = vmatprep.subr.mxu0 0.0
    %1887 = vmatpush2.msra.mxu0 0.0
    %1888 = vmatprep.subr.mxu0 0.0
    %1889 = vmatpush2.msra.mxu0 0.0
    %1890 = vmatprep.subr.mxu0 0.0
    %1891 = vmatpush2.msra.mxu0 0.0
    %1892 = vmatprep.subr.mxu0 0.0
    %1893 = vmatpush2.msra.mxu0 0.0
    %1894 = vmatprep.subr.mxu0 0.0
    %1895 = vmatpush2.msra.mxu0 0.0
    %1896 = vmatprep.subr.mxu0 0.0
    %1897 = vmatpush2.msra.mxu0 0.0
    %1898 = vmatprep.subr.mxu0 0.0
    %1899 = vmatpush2.msra.mxu0 0.0
    %1900 = vmatprep.subr.mxu0 0.0
    %1901 = vmatpush2.msra.mxu0 0.0
    %1902 = vmatprep.subr.mxu0 0.0
    %1903 = vmatpush2.msra.mxu0 0.0
    %1904 = vmatprep.subr.mxu0 0.0
    %1905 = vmatpush2.msra.mxu0 0.0
    %1906 = vmatprep.subr.mxu0 0.0
    %1907 = vmatpush2.msra.mxu0 0.0
    %1908 = vmatprep.subr.mxu0 0.0
    %1909 = vmatpush2.msra.mxu0 0.0
    %1910 = vmatprep.subr.mxu0 0.0
    %1911 = vmatpush2.msra.mxu0 0.0
    %1912 = vmatprep.subr.mxu0 0.0
    %1913 = vmatpush2.msra.mxu0 0.0
    %1914 = vmatprep.mubr.f32.mxu0 0.0
    %1915 = vmatmul.mubr.f32.gmra.mxu0 %v1848
    %v1916 = vpop.f32.mrf.mxu0
    %v1917 = vadd.f32 0.0, %v1916
    %v1918 = vpop.f32.mrf.mxu0
    %v1919 = vadd.f32 0.0, %v1918
    %1920 = vdwg.mxu0
    %v1921 = vadd.f32 %v1314, %v1917
    %v1922 = vadd.f32 %v1315, %v1919
    %v1923 = vxor.u32 %v1921, 2147483648
    %v1924 = vxor.u32 %v1922, 2147483648
    %v1925 = vmul.f32 %v1923, 1.442695
    %v1926 = vpow.pop %v1925
    %v1927 = vmul.f32 %v1924, 1.442695
    %v1928 = vpow.pop %v1927
    %v1929 = vadd.f32 %v1926, 1.0
    %v1930 = vadd.f32 %v1928, 1.0
    %v1931 = vrcp.pop %v1929
    %v1932 = vmul.f32 1.0, %v1931
    %v1933 = vrcp.pop %v1930
    %v1934 = vmul.f32 1.0, %v1933
    %v1935 = vtanh.pop %v1922
    %v1936 = vmul.f32 %v1932, %v1840
    %1938 = vrot.lane.b32.xlu0 %v1935, 64
    %v1939 = vpop.permute.xlu0 %1938
    %v1941 = vmul.f32 %v1932, %v1939
    %1943 = vrot.lane.b32.xlu0 %v1941, 64
    %v1944 = vpop.permute.xlu0 %1943
    %v1946 = vadd.f32 %v1936, %v1944
    %v1947 = vtanh.pop %v1946
    %1949 = vrot.lane.b32.xlu0 %v1947, 64
    %v1950 = vpop.permute.xlu0 %1949
    %v1952 = vmul.f32 %v1934, %v1950
    %v1954 = vsel %vm266, %v1952, 0
    %1956 = vmatprep.subr.mxu0 0.0
    %1957 = vmatpush1.msra.mxu0 0.0
    %1958 = vmatprep.subr.mxu0 0.0
    %1959 = vmatpush1.msra.mxu0 0.0
    %1960 = vmatprep.subr.mxu0 0.0
    %1961 = vmatpush1.msra.mxu0 0.0
    %1962 = vmatprep.subr.mxu0 0.0
    %1963 = vmatpush1.msra.mxu0 0.0
    %1964 = vmatprep.subr.mxu0 0.0
    %1965 = vmatpush1.msra.mxu0 0.0
    %1966 = vmatprep.subr.mxu0 0.0
    %1967 = vmatpush1.msra.mxu0 0.0
    %1968 = vmatprep.subr.mxu0 0.0
    %1969 = vmatpush1.msra.mxu0 0.0
    %1970 = vmatprep.subr.mxu0 0.0
    %1971 = vmatpush1.msra.mxu0 0.0
    %1972 = vmatprep.subr.mxu0 %v1303
    %1973 = vmatpush1.msra.mxu0 %v1302
    %1974 = vmatprep.subr.mxu0 %v1301
    %1975 = vmatpush1.msra.mxu0 %v1300
    %1976 = vmatprep.subr.mxu0 %v1299
    %1977 = vmatpush1.msra.mxu0 %v1298
    %1978 = vmatprep.subr.mxu0 %v1297
    %1979 = vmatpush1.msra.mxu0 %v1296
    %1980 = vmatprep.subr.mxu0 %v1295
    %1981 = vmatpush1.msra.mxu0 %v1294
    %1982 = vmatprep.subr.mxu0 %v1293
    %1983 = vmatpush1.msra.mxu0 %v1292
    %1984 = vmatprep.subr.mxu0 %v1291
    %1985 = vmatpush1.msra.mxu0 %v1290
    %1986 = vmatprep.subr.mxu0 %v1289
    %1987 = vmatpush1.msra.mxu0 %v1288
    %1988 = vmatprep.subr.mxu0 0.0
    %1989 = vmatpush2.msra.mxu0 0.0
    %1990 = vmatprep.subr.mxu0 0.0
    %1991 = vmatpush2.msra.mxu0 0.0
    %1992 = vmatprep.subr.mxu0 0.0
    %1993 = vmatpush2.msra.mxu0 0.0
    %1994 = vmatprep.subr.mxu0 0.0
    %1995 = vmatpush2.msra.mxu0 0.0
    %1996 = vmatprep.subr.mxu0 0.0
    %1997 = vmatpush2.msra.mxu0 0.0
    %1998 = vmatprep.subr.mxu0 0.0
    %1999 = vmatpush2.msra.mxu0 0.0
    %2000 = vmatprep.subr.mxu0 0.0
    %2001 = vmatpush2.msra.mxu0 0.0
    %2002 = vmatprep.subr.mxu0 0.0
    %2003 = vmatpush2.msra.mxu0 0.0
    %2004 = vmatprep.subr.mxu0 0.0
    %2005 = vmatpush2.msra.mxu0 0.0
    %2006 = vmatprep.subr.mxu0 0.0
    %2007 = vmatpush2.msra.mxu0 0.0
    %2008 = vmatprep.subr.mxu0 0.0
    %2009 = vmatpush2.msra.mxu0 0.0
    %2010 = vmatprep.subr.mxu0 0.0
    %2011 = vmatpush2.msra.mxu0 0.0
    %2012 = vmatprep.subr.mxu0 0.0
    %2013 = vmatpush2.msra.mxu0 0.0
    %2014 = vmatprep.subr.mxu0 0.0
    %2015 = vmatpush2.msra.mxu0 0.0
    %2016 = vmatprep.subr.mxu0 0.0
    %2017 = vmatpush2.msra.mxu0 0.0
    %2018 = vmatprep.subr.mxu0 0.0
    %2019 = vmatpush2.msra.mxu0 0.0
    %2020 = vmatprep.mubr.f32.mxu0 0.0
    %2021 = vmatmul.mubr.f32.gmra.mxu0 %v1954
    %v2022 = vpop.f32.mrf.mxu0
    %v2023 = vadd.f32 0.0, %v2022
    %v2024 = vpop.f32.mrf.mxu0
    %v2025 = vadd.f32 0.0, %v2024
    %2026 = vdwg.mxu0
    %v2027 = vadd.f32 %v1316, %v2023
    %v2028 = vadd.f32 %v1317, %v2025
    %v2029 = vxor.u32 %v2027, 2147483648
    %v2030 = vxor.u32 %v2028, 2147483648
    %v2031 = vmul.f32 %v2029, 1.442695
    %v2032 = vpow.pop %v2031
    %v2033 = vmul.f32 %v2030, 1.442695
    %v2034 = vpow.pop %v2033
    %v2035 = vadd.f32 %v2032, 1.0
    %v2036 = vadd.f32 %v2034, 1.0
    %v2037 = vrcp.pop %v2035
    %v2038 = vmul.f32 1.0, %v2037
    %v2039 = vrcp.pop %v2036
    %v2040 = vmul.f32 1.0, %v2039
    %v2041 = vtanh.pop %v2028
    %v2042 = vmul.f32 %v2038, %v1946
    %2044 = vrot.lane.b32.xlu0 %v2041, 64
    %v2045 = vpop.permute.xlu0 %2044
    %v2047 = vmul.f32 %v2038, %v2045
    %2049 = vrot.lane.b32.xlu0 %v2047, 64
    %v2050 = vpop.permute.xlu0 %2049
    %v2052 = vadd.f32 %v2042, %v2050
    %v2053 = vtanh.pop %v2052
    %2055 = vrot.lane.b32.xlu0 %v2053, 64
    %v2056 = vpop.permute.xlu0 %2055
    %v2058 = vmul.f32 %v2040, %v2056
    %v2060 = vsel %vm266, %v2058, 0
    %2062 = vmatprep.subr.mxu0 0.0
    %2063 = vmatpush1.msra.mxu0 0.0
    %2064 = vmatprep.subr.mxu0 0.0
    %2065 = vmatpush1.msra.mxu0 0.0
    %2066 = vmatprep.subr.mxu0 0.0
    %2067 = vmatpush1.msra.mxu0 0.0
    %2068 = vmatprep.subr.mxu0 0.0
    %2069 = vmatpush1.msra.mxu0 0.0
    %2070 = vmatprep.subr.mxu0 0.0
    %2071 = vmatpush1.msra.mxu0 0.0
    %2072 = vmatprep.subr.mxu0 0.0
    %2073 = vmatpush1.msra.mxu0 0.0
    %2074 = vmatprep.subr.mxu0 0.0
    %2075 = vmatpush1.msra.mxu0 0.0
    %2076 = vmatprep.subr.mxu0 0.0
    %2077 = vmatpush1.msra.mxu0 0.0
    %2078 = vmatprep.subr.mxu0 %v1303
    %2079 = vmatpush1.msra.mxu0 %v1302
    %2080 = vmatprep.subr.mxu0 %v1301
    %2081 = vmatpush1.msra.mxu0 %v1300
    %2082 = vmatprep.subr.mxu0 %v1299
    %2083 = vmatpush1.msra.mxu0 %v1298
    %2084 = vmatprep.subr.mxu0 %v1297
    %2085 = vmatpush1.msra.mxu0 %v1296
    %2086 = vmatprep.subr.mxu0 %v1295
    %2087 = vmatpush1.msra.mxu0 %v1294
    %2088 = vmatprep.subr.mxu0 %v1293
    %2089 = vmatpush1.msra.mxu0 %v1292
    %2090 = vmatprep.subr.mxu0 %v1291
    %2091 = vmatpush1.msra.mxu0 %v1290
    %2092 = vmatprep.subr.mxu0 %v1289
    %2093 = vmatpush1.msra.mxu0 %v1288
    %2094 = vmatprep.subr.mxu0 0.0
    %2095 = vmatpush2.msra.mxu0 0.0
    %2096 = vmatprep.subr.mxu0 0.0
    %2097 = vmatpush2.msra.mxu0 0.0
    %2098 = vmatprep.subr.mxu0 0.0
    %2099 = vmatpush2.msra.mxu0 0.0
    %2100 = vmatprep.subr.mxu0 0.0
    %2101 = vmatpush2.msra.mxu0 0.0
    %2102 = vmatprep.subr.mxu0 0.0
    %2103 = vmatpush2.msra.mxu0 0.0
    %2104 = vmatprep.subr.mxu0 0.0
    %2105 = vmatpush2.msra.mxu0 0.0
    %2106 = vmatprep.subr.mxu0 0.0
    %2107 = vmatpush2.msra.mxu0 0.0
    %2108 = vmatprep.subr.mxu0 0.0
    %2109 = vmatpush2.msra.mxu0 0.0
    %2110 = vmatprep.subr.mxu0 0.0
    %2111 = vmatpush2.msra.mxu0 0.0
    %2112 = vmatprep.subr.mxu0 0.0
    %2113 = vmatpush2.msra.mxu0 0.0
    %2114 = vmatprep.subr.mxu0 0.0
    %2115 = vmatpush2.msra.mxu0 0.0
    %2116 = vmatprep.subr.mxu0 0.0
    %2117 = vmatpush2.msra.mxu0 0.0
    %2118 = vmatprep.subr.mxu0 0.0
    %2119 = vmatpush2.msra.mxu0 0.0
    %2120 = vmatprep.subr.mxu0 0.0
    %2121 = vmatpush2.msra.mxu0 0.0
    %2122 = vmatprep.subr.mxu0 0.0
    %2123 = vmatpush2.msra.mxu0 0.0
    %2124 = vmatprep.subr.mxu0 0.0
    %2125 = vmatpush2.msra.mxu0 0.0
    %2126 = vmatprep.mubr.f32.mxu0 0.0
    %2127 = vmatmul.mubr.f32.gmra.mxu0 %v2060
    %v2128 = vpop.f32.mrf.mxu0
    %v2129 = vadd.f32 0.0, %v2128
    %v2130 = vpop.f32.mrf.mxu0
    %v2131 = vadd.f32 0.0, %v2130
    %2132 = vdwg.mxu0
    %v2133 = vadd.f32 %v1318, %v2129
    %v2134 = vadd.f32 %v1319, %v2131
    %v2135 = vxor.u32 %v2133, 2147483648
    %v2136 = vxor.u32 %v2134, 2147483648
    %v2137 = vmul.f32 %v2135, 1.442695
    %v2138 = vpow.pop %v2137
    %v2139 = vmul.f32 %v2136, 1.442695
    %v2140 = vpow.pop %v2139
    %v2141 = vadd.f32 %v2138, 1.0
    %v2142 = vadd.f32 %v2140, 1.0
    %v2143 = vrcp.pop %v2141
    %v2144 = vmul.f32 1.0, %v2143
    %v2145 = vrcp.pop %v2142
    %v2146 = vmul.f32 1.0, %v2145
    %v2147 = vtanh.pop %v2134
    %v2148 = vmul.f32 %v2144, %v2052
    %2150 = vrot.lane.b32.xlu0 %v2147, 64
    %v2151 = vpop.permute.xlu0 %2150
    %v2153 = vmul.f32 %v2144, %v2151
    %2155 = vrot.lane.b32.xlu0 %v2153, 64
    %v2156 = vpop.permute.xlu0 %2155
    %v2158 = vadd.f32 %v2148, %v2156
    %v2159 = vtanh.pop %v2158
    %2161 = vrot.lane.b32.xlu0 %v2159, 64
    %v2162 = vpop.permute.xlu0 %2161
    %v2164 = vmul.f32 %v2146, %v2162
    %v2165 = vld [vmem:[%s7] sm:$0xff]
    %v2166 = vld [vmem:[%s7 + $0x8] sm:$0xff]
    %v2167 = vld [vmem:[%s7 + $0x10] sm:$0xff]
    %v2168 = vld [vmem:[%s7 + $0x18] sm:$0xff]
    %v2169 = vld [vmem:[%s7 + $0x20] sm:$0xff]
    %v2170 = vld [vmem:[%s7 + $0x28] sm:$0xff]
    %v2171 = vld [vmem:[%s7 + $0x30] sm:$0xff]
    %v2172 = vld [vmem:[%s7 + $0x38] sm:$0xff]
    %v2173 = vld [vmem:[%s8] sm:$0x1]
    %v2175 = vlaneseq
    %v2176 = vshrl.u32 %v2175, 7
    %v2177 = vsub.s32 0, %v2176
    %v2178 = vrot.slane %v2173, %v2177
    %v2181 = vsel %vm266, %v2164, 0
    %2183 = vmatprep.subr.mxu0 0.0
    %2184 = vmatpush1.msra.mxu0 0.0
    %2185 = vmatprep.subr.mxu0 0.0
    %2186 = vmatpush1.msra.mxu0 0.0
    %2187 = vmatprep.subr.mxu0 0.0
    %2188 = vmatpush1.msra.mxu0 0.0
    %2189 = vmatprep.subr.mxu0 0.0
    %2190 = vmatpush1.msra.mxu0 0.0
    %2191 = vmatprep.subr.mxu0 0.0
    %2192 = vmatpush1.msra.mxu0 0.0
    %2193 = vmatprep.subr.mxu0 0.0
    %2194 = vmatpush1.msra.mxu0 0.0
    %2195 = vmatprep.subr.mxu0 0.0
    %2196 = vmatpush1.msra.mxu0 0.0
    %2197 = vmatprep.subr.mxu0 0.0
    %2198 = vmatpush1.msra.mxu0 0.0
    %2199 = vmatprep.subr.mxu0 0.0
    %2200 = vmatpush1.msra.mxu0 %v2172
    %2201 = vmatprep.subr.mxu0 0.0
    %2202 = vmatpush1.msra.mxu0 %v2171
    %2203 = vmatprep.subr.mxu0 0.0
    %2204 = vmatpush1.msra.mxu0 %v2170
    %2205 = vmatprep.subr.mxu0 0.0
    %2206 = vmatpush1.msra.mxu0 %v2169
    %2207 = vmatprep.subr.mxu0 0.0
    %2208 = vmatpush1.msra.mxu0 %v2168
    %2209 = vmatprep.subr.mxu0 0.0
    %2210 = vmatpush1.msra.mxu0 %v2167
    %2211 = vmatprep.subr.mxu0 0.0
    %2212 = vmatpush1.msra.mxu0 %v2166
    %2213 = vmatprep.subr.mxu0 0.0
    %2214 = vmatpush1.msra.mxu0 %v2165
    %2215 = vmatprep.subr.mxu0 0.0
    %2216 = vmatpush2.msra.mxu0 0.0
    %2217 = vmatprep.subr.mxu0 0.0
    %2218 = vmatpush2.msra.mxu0 0.0
    %2219 = vmatprep.subr.mxu0 0.0
    %2220 = vmatpush2.msra.mxu0 0.0
    %2221 = vmatprep.subr.mxu0 0.0
    %2222 = vmatpush2.msra.mxu0 0.0
    %2223 = vmatprep.subr.mxu0 0.0
    %2224 = vmatpush2.msra.mxu0 0.0
    %2225 = vmatprep.subr.mxu0 0.0
    %2226 = vmatpush2.msra.mxu0 0.0
    %2227 = vmatprep.subr.mxu0 0.0
    %2228 = vmatpush2.msra.mxu0 0.0
    %2229 = vmatprep.subr.mxu0 0.0
    %2230 = vmatpush2.msra.mxu0 0.0
    %2231 = vmatprep.subr.mxu0 0.0
    %2232 = vmatpush2.msra.mxu0 0.0
    %2233 = vmatprep.subr.mxu0 0.0
    %2234 = vmatpush2.msra.mxu0 0.0
    %2235 = vmatprep.subr.mxu0 0.0
    %2236 = vmatpush2.msra.mxu0 0.0
    %2237 = vmatprep.subr.mxu0 0.0
    %2238 = vmatpush2.msra.mxu0 0.0
    %2239 = vmatprep.subr.mxu0 0.0
    %2240 = vmatpush2.msra.mxu0 0.0
    %2241 = vmatprep.subr.mxu0 0.0
    %2242 = vmatpush2.msra.mxu0 0.0
    %2243 = vmatprep.subr.mxu0 0.0
    %2244 = vmatpush2.msra.mxu0 0.0
    %2245 = vmatprep.subr.mxu0 0.0
    %2246 = vmatpush2.msra.mxu0 0.0
    %2247 = vmatprep.mubr.f32.mxu0 0.0
    %2248 = vmatmul.mubr.f32.gmra.mxu0 %v2181
    %v2249 = vpop.f32.mrf.mxu0
    %v2250 = vadd.f32 %v2178, %v2249
    %v2251 = vpop.f32.mrf.mxu0
    %2252 = vdwg.mxu0
    %2253 = vst.msk [vmem:[%s9] sm:$0xff] %vm96, %v2250
    // Predicated region
    $region46: #{encoder_forward.1} parent=1 // pred_check
      _
    $region47: #{encoder_forward.1} parent=1 // pred_check_branch
      %2255 = sbr.rel (0) target = $region49
    $region48: #{encoder_forward.1} parent=1 // pred_region
      _
    $region49: #{encoder_forward.1} parent=1 // pred_fallthru
      _
    // Predicated region
    $region50: #{encoder_forward.1} parent=1 // pred_check
      _
    $region51: #{encoder_forward.1} parent=1 // pred_check_branch
      %2257 = sbr.rel (0) target = $region53
    $region52: #{encoder_forward.1} parent=1 // pred_region
      _
    $region53: #{encoder_forward.1} parent=1 // pred_fallthru
      _
    %2258 = vsyncpa [#allocation3], 1
    %2259 = vsyncpa [#allocation5], 1

</llo_original>
